<compile_context>
chip_gen: v5e
topology: v5e:2x2
jax: 0.10.0
libtpu: 0.0.40
codegen_flags: <defaults>
</compile_context>

<pallas_src>
import functools
import numpy as np

import jax
import jax.numpy as jnp
from jax.experimental import pallas as pl
from jax.experimental.pallas import tpu as pltpu


# ----------------------------------------------------------------------------
# helpers
# ----------------------------------------------------------------------------

def _round_up(x, m):
    return (x + m - 1) // m * m


def _cp(c):
    """Channel count as stored on device (lane padded to a multiple of 128)."""
    return _round_up(c, 128)


def _pick_tm(M):
    for t in (512, 256, 128, 64, 32, 16, 8):
        if M % t == 0:
            return t
    return None


def _pick_tk(Kp):
    if Kp <= 2048:
        return Kp
    for cand in range(2048, 127, -128):
        if Kp % cand == 0:
            return cand
    return 128


_VMEM_LIMIT = 48 * 1024 * 1024   # safe on v5e/v6e (128 MiB) and v7x (64 MiB)


# ----------------------------------------------------------------------------
# Pallas kernels
# ----------------------------------------------------------------------------

def _matmul_bias_kernel(*refs, relu, has_res):
    """bf16 matmul (f32 accumulate) + bias (+fused residual) (+ReLU)."""
    if has_res:
        a_ref, w_ref, b_ref, r_ref, o_ref, acc_ref = refs
    else:
        a_ref, w_ref, b_ref, o_ref, acc_ref = refs
        r_ref = None

    @pl.when(pl.program_id(2) == 0)
    def _():
        acc_ref[...] = jnp.zeros_like(acc_ref)

    acc_ref[...] += jnp.dot(a_ref[...], w_ref[...],
                            preferred_element_type=jnp.float32)

    @pl.when(pl.program_id(2) == pl.num_programs(2) - 1)
    def _():
        y = acc_ref[...] + b_ref[...]
        if has_res:
            y = y + r_ref[...].astype(jnp.float32)
        if relu:
            y = jnp.maximum(y, 0.0)
        o_ref[...] = y.astype(o_ref.dtype)


def _conv3x3_kernel(x_ref, w_ref, b_ref, o_ref, acc_ref, *, w2, relu):
    """In-kernel im2col for a stride-1 3x3 conv.

    x_ref : (1, Lp, Cin)  spatially padded activation, rows flattened
    w_ref : (9, Cin, tn)  per-tap weights (BN scale folded, bf16)
    o_ref : (1, Mo, tn)   Mo = H*(W+2); pad columns are garbage, sliced off
                          in the wrapper.
    """
    Mo = o_ref.shape[1]
    acc_ref[...] = jnp.dot(x_ref[0, pl.ds(0, Mo), :], w_ref[0],
                           preferred_element_type=jnp.float32)
    for t in range(1, 9):
        kh, kw = t // 3, t % 3
        off = kh * w2 + kw
        acc_ref[...] += jnp.dot(x_ref[0, pl.ds(off, Mo), :], w_ref[t],
                                preferred_element_type=jnp.float32)
    y = acc_ref[...] + b_ref[...]
    if relu:
        y = jnp.maximum(y, 0.0)
    o_ref[0] = y.astype(o_ref.dtype)


def _maxpool9_kernel(ee_ref, eo_ref, oe_ref, oo_ref, o_ref):
    """3x3 / stride-2 / pad-1 max pool over 4 parity-split phase arrays."""
    OH, OW = o_ref.shape[1], o_ref.shape[2]

    def win(ref, r, c):
        return ref[0, pl.ds(r, OH), pl.ds(c, OW), :]

    m = win(ee_ref, 0, 0)
    m = jnp.maximum(m, win(ee_ref, 0, 1))
    m = jnp.maximum(m, win(ee_ref, 1, 0))
    m = jnp.maximum(m, win(ee_ref, 1, 1))
    m = jnp.maximum(m, win(eo_ref, 0, 0))
    m = jnp.maximum(m, win(eo_ref, 1, 0))
    m = jnp.maximum(m, win(oe_ref, 0, 0))
    m = jnp.maximum(m, win(oe_ref, 0, 1))
    m = jnp.maximum(m, win(oo_ref, 0, 0))
    o_ref[0] = m


def _adaptive_pool_kernel(p_ref, x_ref, o_ref):
    """out[p, c] = sum_k pool[p, k] * x[k, c] for one batch element."""
    o_ref[0] = jnp.dot(p_ref[...], x_ref[0],
                       preferred_element_type=jnp.float32)


# ----------------------------------------------------------------------------
# Wrappers around pallas_call
# ----------------------------------------------------------------------------

def fused_matmul(a, w, bias, res=None, *, relu=False):
    """out = act(A @ W + bias (+ res)); A bf16 (M,K<=Kp), W bf16 (Kp,Np) prepadded."""
    M, K = a.shape
    Kp, Np = w.shape
    if K != Kp:
        a = jnp.pad(a, ((0, 0), (0, Kp - K)))

    tm = _pick_tm(M)
    Mp = M
    if tm is None:                       # ragged M (does not occur in this net)
        tm = min(256, _round_up(M, 8))
        Mp = _round_up(M, tm)
        a = jnp.pad(a, ((0, Mp - M), (0, 0)))
        if res is not None:
            res = jnp.pad(res, ((0, Mp - M), (0, 0)))

    tn = min(2048 if Mp <= 128 else 1024, Np)
    tk = _pick_tk(Kp)
    # keep >=2 parallel grid blocks when cheaply possible (helps v7x 2-TC parts,
    # near-free on v5e/v6e at these sizes)
    if Mp // tm == 1 and Np // tn == 1:
        if Np >= 256:
            tn = Np // 2
        elif tm >= 16:
            tm = tm // 2

    bias2 = bias.reshape(1, Np)
    has_res = res is not None
    in_specs = [
        pl.BlockSpec((tm, tk), lambda i, j, k: (i, k)),
        pl.BlockSpec((tk, tn), lambda i, j, k: (k, j)),
        pl.BlockSpec((1, tn), lambda i, j, k: (0, j)),
    ]
    args = [a, w, bias2]
    if has_res:
        in_specs.append(pl.BlockSpec((tm, tn), lambda i, j, k: (i, j)))
        args.append(res)

    out = pl.pallas_call(
        functools.partial(_matmul_bias_kernel, relu=relu, has_res=has_res),
        out_shape=jax.ShapeDtypeStruct((Mp, Np), jnp.bfloat16),
        grid_spec=pltpu.PrefetchScalarGridSpec(
            num_scalar_prefetch=0,
            grid=(Mp // tm, Np // tn, Kp // tk),
            in_specs=in_specs,
            out_specs=pl.BlockSpec((tm, tn), lambda i, j, k: (i, j)),
            scratch_shapes=[pltpu.VMEM((tm, tn), jnp.float32)],
        ),
        compiler_params=pltpu.CompilerParams(
            dimension_semantics=("parallel", "parallel", "arbitrary"),
            vmem_limit_bytes=_VMEM_LIMIT),
    )(*args)
    return out[:M] if Mp != M else out


@functools.partial(jax.jit, static_argnames=("relu",))
def conv1x1(x, w, bias, res=None, *, relu=False):
    """1x1 conv (+BN folded) as a Pallas matmul; no pad/slice copies needed."""
    B, H, W, Cin = x.shape
    Np = w.shape[1]
    a = x.reshape(B * H * W, Cin)
    r = None if res is None else res.reshape(B * H * W, Np)
    y = fused_matmul(a, w, bias, r, relu=relu)
    return y.reshape(B, H, W, Np)


@functools.partial(jax.jit, static_argnames=("relu",))
def conv3x3_s1(x, w9, bias, *, relu=True):
    """Stride-1 3x3 conv, pad 1.  The activation is spatially padded once,
    rows are flattened, and the Pallas kernel accumulates the 9 taps with
    offset slices (no XLA im2col, no 9x activation replication)."""
    B, H, W, Cin = x.shape
    Np = w9.shape[2]
    w2 = W + 2
    # top pad 1, bottom pad 2 (1 needed + 1 slack row so the last tap's
    # offset slice for the discarded pad columns stays in bounds), l/r pad 1.
    xp = jnp.pad(x, ((0, 0), (1, 2), (1, 1), (0, 0)))
    Lp = (H + 3) * w2
    xf = xp.reshape(B, Lp, Cin)
    Mo = H * w2
    tn = min(Np, 512)
    bias2 = bias.reshape(1, Np)

    out = pl.pallas_call(
        functools.partial(_conv3x3_kernel, w2=w2, relu=relu),
        out_shape=jax.ShapeDtypeStruct((B, Mo, Np), jnp.bfloat16),
        grid_spec=pltpu.PrefetchScalarGridSpec(
            num_scalar_prefetch=0,
            grid=(B, Np // tn),
            in_specs=[
                pl.BlockSpec((1, Lp, Cin), lambda b, j: (b, 0, 0)),
                pl.BlockSpec((9, Cin, tn), lambda b, j: (0, 0, j)),
                pl.BlockSpec((1, tn), lambda b, j: (0, j)),
            ],
            out_specs=pl.BlockSpec((1, Mo, tn), lambda b, j: (b, 0, j)),
            scratch_shapes=[pltpu.VMEM((Mo, tn), jnp.float32)],
        ),
        compiler_params=pltpu.CompilerParams(
            dimension_semantics=("parallel", "parallel"),
            vmem_limit_bytes=_VMEM_LIMIT),
    )(xf, w9, bias2)
    # drop the 2 garbage pad columns per row
    return out.reshape(B, H, w2, Np)[:, :, :W, :]


@functools.partial(jax.jit,
                   static_argnames=("kh", "kw", "stride", "padding", "relu"))
def conv_im2col(x, w, bias, *, kh, kw, stride, padding, relu):
    """Fallback conv (stem 7x7/s2 and the three stride-2 3x3 convs):
    XLA im2col feeding the fused Pallas matmul."""
    # TODO(synk): fold the tap axis of the stride-2 convs into the kernel as
    # well (phase-split input) to remove the remaining im2col replication.
    B, H, W, C = x.shape
    OH = (H + 2 * padding - kh) // stride + 1
    OW = (W + 2 * padding - kw) // stride + 1
    xp = jnp.pad(x, ((0, 0), (padding, padding), (padding, padding), (0, 0)))
    cols = [xp[:, i:i + OH * stride:stride, j:j + OW * stride:stride, :]
            for i in range(kh) for j in range(kw)]
    a = jnp.stack(cols, axis=3).reshape(B * OH * OW, kh * kw * C)
    y = fused_matmul(a, w, bias, relu=relu)
    return y.reshape(B, OH, OW, -1)


@jax.jit
def maxpool3x3_s2(x):
    """3x3 / stride-2 / pad-1 max pool.  XLA does a single parity (phase)
    split of the padded input; one Pallas kernel takes the 9-tap max over
    unit-stride halo windows of the 4 phase arrays."""
    B, H, W, C = x.shape
    OH = (H - 1) // 2 + 1
    OW = (W - 1) // 2 + 1
    neg = jnp.asarray(-jnp.inf, x.dtype)
    ph = (H + 2) % 2
    pw = (W + 2) % 2
    xp = jnp.pad(x, ((0, 0), (1, 1 + ph), (1, 1 + pw), (0, 0)),
                 constant_values=neg)
    ee = xp[:, 0::2, 0::2, :]
    eo = xp[:, 0::2, 1::2, :]
    oe = xp[:, 1::2, 0::2, :]
    oo = xp[:, 1::2, 1::2, :]
    Hs, Ws = ee.shape[1], ee.shape[2]

    out = pl.pallas_call(
        _maxpool9_kernel,
        out_shape=jax.ShapeDtypeStruct((B, OH, OW, C), x.dtype),
        grid_spec=pltpu.PrefetchScalarGridSpec(
            num_scalar_prefetch=0,
            grid=(B,),
            in_specs=[pl.BlockSpec((1, Hs, Ws, C),
                                   lambda b: (b, 0, 0, 0))] * 4,
            out_specs=pl.BlockSpec((1, OH, OW, C), lambda b: (b, 0, 0, 0)),
        ),
        compiler_params=pltpu.CompilerParams(
            dimension_semantics=("parallel",),
            vmem_limit_bytes=_VMEM_LIMIT),
    )(ee, eo, oe, oo)
    return out


@functools.partial(jax.jit, static_argnames=("out_size",))
def adaptive_avg_pool(x, out_size=14):
    """AdaptiveAvgPool2d((S,S)) as a per-batch (S*S, H*W) pooling-matrix
    matmul; bf16 operands with f32 accumulation, channels lane-dense."""
    B, H, W, C = x.shape
    HW, P = H * W, out_size * out_size

    def pool_matrix(in_size, o_size):
        m = np.zeros((o_size, in_size), dtype=np.float32)
        for i in range(o_size):
            s = (i * in_size) // o_size
            e = -(-((i + 1) * in_size) // o_size)   # ceil
            m[i, s:e] = 1.0 / (e - s)
        return m

    Ph, Pw = pool_matrix(H, out_size), pool_matrix(W, out_size)
    pool = np.einsum("oh,pw->ophw", Ph, Pw).reshape(P, HW)

    HWp, Cp = _round_up(HW, 8), _round_up(C, 128)
    pool_p = np.zeros((P, HWp), np.float32)
    pool_p[:, :HW] = pool
    x_p = x.reshape(B, HW, C)
    if HWp != HW or Cp != C:
        x_p = jnp.pad(x_p, ((0, 0), (0, HWp - HW), (0, Cp - C)))

    out = pl.pallas_call(
        _adaptive_pool_kernel,
        out_shape=jax.ShapeDtypeStruct((B, P, Cp), jnp.float32),
        grid_spec=pltpu.PrefetchScalarGridSpec(
            num_scalar_prefetch=0,
            grid=(B,),
            in_specs=[pl.BlockSpec((P, HWp), lambda b: (0, 0)),
                      pl.BlockSpec((1, HWp, Cp), lambda b: (b, 0, 0))],
            out_specs=pl.BlockSpec((1, P, Cp), lambda b: (b, 0, 0)),
        ),
        compiler_params=pltpu.CompilerParams(
            dimension_semantics=("parallel",)),
    )(jnp.asarray(pool_p, jnp.bfloat16), x_p)
    return out[:, :, :C].reshape(B, out_size, out_size, C)


# ----------------------------------------------------------------------------
# Deterministic synthetic ResNet-152 parameters (inference / eval semantics)
# ----------------------------------------------------------------------------

class KeyGen:
    def __init__(self, seed=0):
        self._base = jax.random.PRNGKey(seed)
        self._i = 0

    def __call__(self):
        k = jax.random.fold_in(self._base, self._i)
        self._i += 1
        return k


def _he_conv(key, kh, kw, cin, cout):
    fan_in = kh * kw * cin
    return (jax.random.normal(key, (kh, kw, cin, cout), jnp.float32)
            * np.sqrt(2.0 / fan_in))


def _bn_params(key, c, gamma_scale=1.0):
    # eval-mode BN statistics (synthetic running_mean=0, running_var=1).
    k1, k2 = jax.random.split(key)
    gamma = gamma_scale * (1.0 + 0.1 * jax.random.normal(k1, (c,), jnp.float32))
    beta = 0.1 * jax.random.normal(k2, (c,), jnp.float32)
    mean = jnp.zeros((c,), jnp.float32)
    var = jnp.ones((c,), jnp.float32)
    return gamma, beta, mean, var


def _bottleneck_params(kg, cin, mid, cout, stride):
    blk = {
        "w1": _he_conv(kg(), 1, 1, cin, mid), "bn1": _bn_params(kg(), mid),
        "w2": _he_conv(kg(), 3, 3, mid, mid), "bn2": _bn_params(kg(), mid),
        # small last-BN gamma keeps the random-weight net bounded over 50 blocks.
        "w3": _he_conv(kg(), 1, 1, mid, cout),
        "bn3": _bn_params(kg(), cout, gamma_scale=0.1),
        "stride": stride,
    }
    if stride != 1 or cin != cout:
        blk["wd"] = _he_conv(kg(), 1, 1, cin, cout)
        blk["bnd"] = _bn_params(kg(), cout)
    return blk


def resnet152_params(kg):
    params = {"conv1_w": _he_conv(kg(), 7, 7, 3, 64), "bn1": _bn_params(kg(), 64)}
    # ResNet-152: bottleneck blocks [3, 8, 36, 3]
    cfg = [(3, 64, 256, 1), (8, 128, 512, 2), (36, 256, 1024, 2), (3, 512, 2048, 2)]
    cin = 64
    layers = []
    for nblocks, mid, cout, stride in cfg:
        blocks = [_bottleneck_params(kg, cin, mid, cout, stride)]
        cin = cout
        for _ in range(nblocks - 1):
            blocks.append(_bottleneck_params(kg, cin, mid, cout, 1))
        layers.append(blocks)
    params["layers"] = layers
    return params


# ----------------------------------------------------------------------------
# One-time weight preparation (BN fold, bf16 cast, kernel layout, lane pad)
# ----------------------------------------------------------------------------

def _fold_bn(w, bn, eps=1e-5):
    gamma, beta, mean, var = bn
    scale = gamma * jax.lax.rsqrt(var + eps)        # general eval-mode fold
    return w * scale, beta - mean * scale


def _prep_conv1x1(w, bn):
    w_f, bias = _fold_bn(w, bn)
    cin, cout = w.shape[2], w.shape[3]
    kp, np_ = _cp(cin), _cp(cout)
    wmat = jnp.zeros((kp, np_), jnp.bfloat16)
    wmat = wmat.at[:cin, :cout].set(w_f.reshape(cin, cout).astype(jnp.bfloat16))
    b = jnp.zeros((np_,), jnp.float32).at[:cout].set(bias)
    return {"w": wmat, "b": b}


def _prep_conv3x3(w, bn):
    w_f, bias = _fold_bn(w, bn)
    _, _, cin, cout = w.shape
    cinp, np_ = _cp(cin), _cp(cout)
    w9 = jnp.zeros((9, cinp, np_), jnp.bfloat16)
    w9 = w9.at[:, :cin, :cout].set(w_f.reshape(9, cin, cout).astype(jnp.bfloat16))
    b = jnp.zeros((np_,), jnp.float32).at[:cout].set(bias)
    return {"w9": w9, "b": b}


def _prep_conv_im2col(w, bn, cin_stored):
    w_f, bias = _fold_bn(w, bn)
    kh, kw, cin, cout = w.shape
    np_ = _cp(cout)
    wt = jnp.zeros((kh * kw, cin_stored, np_), jnp.bfloat16)
    wt = wt.at[:, :cin, :cout].set(
        w_f.reshape(kh * kw, cin, cout).astype(jnp.bfloat16))
    wmat = wt.reshape(kh * kw * cin_stored, np_)
    kp = _round_up(wmat.shape[0], 128)
    if kp != wmat.shape[0]:
        wmat = jnp.pad(wmat, ((0, kp - wmat.shape[0]), (0, 0)))
    b = jnp.zeros((np_,), jnp.float32).at[:cout].set(bias)
    return {"w": wmat, "b": b}


def prepare_encoder_params(raw):
    """Run once at parameter-load time; the forward only reads bf16 weights."""
    prep = {"stem": _prep_conv_im2col(raw["conv1_w"], raw["bn1"], cin_stored=3)}
    layers = []
    for layer in raw["layers"]:
        blocks = []
        for blk in layer:
            mid_stored = _cp(blk["w2"].shape[2])
            b = {
                "stride": blk["stride"],
                "c1": _prep_conv1x1(blk["w1"], blk["bn1"]),
                "c3": _prep_conv1x1(blk["w3"], blk["bn3"]),
            }
            if blk["stride"] == 1:
                b["c2"] = _prep_conv3x3(blk["w2"], blk["bn2"])
            else:
                b["c2"] = _prep_conv_im2col(blk["w2"], blk["bn2"],
                                            cin_stored=mid_stored)
            if "wd" in blk:
                b["cd"] = _prep_conv1x1(blk["wd"], blk["bnd"])
            blocks.append(b)
        layers.append(blocks)
    prep["layers"] = layers
    return prep


# ----------------------------------------------------------------------------
# Encoder forward (matches the PyTorch module's forward semantics)
# ----------------------------------------------------------------------------

def encoder_forward(images_nchw, prep, encoded_image_size=14):
    # NCHW (PyTorch) -> NHWC; activations kept in bf16 (channels lane-padded
    # to multiples of 128, pad channels are exactly zero); matmuls accumulate
    # in f32; final output is f32.
    x = jnp.transpose(images_nchw, (0, 2, 3, 1)).astype(jnp.bfloat16)

    # stem: conv7x7/s2 + BN + ReLU + maxpool3x3/s2
    stem = prep["stem"]
    x = conv_im2col(x, stem["w"], stem["b"], kh=7, kw=7, stride=2, padding=3,
                    relu=True)
    x = maxpool3x3_s2(x)

    # layer1..layer4 bottleneck stacks
    for layer in prep["layers"]:
        for blk in layer:
            s = blk["stride"]
            identity = x
            c1 = blk["c1"]
            out = conv1x1(x, c1["w"], c1["b"], relu=True)
            c2 = blk["c2"]
            if s == 1:
                out = conv3x3_s1(out, c2["w9"], c2["b"], relu=True)
            else:
                out = conv_im2col(out, c2["w"], c2["b"], kh=3, kw=3, stride=s,
                                  padding=1, relu=True)
            if "cd" in blk:
                cd = blk["cd"]
                xs = x if s == 1 else x[:, ::s, ::s, :]
                identity = conv1x1(xs, cd["w"], cd["b"], relu=False)
            # conv3 + BN + residual add + ReLU fused into one matmul epilogue
            c3 = blk["c3"]
            x = conv1x1(out, c3["w"], c3["b"], identity, relu=True)

    # adaptive pool to (14, 14); output is NHWC == PyTorch's permute(0, 2, 3, 1)
    return adaptive_avg_pool(x, out_size=encoded_image_size)


if __name__ == "__main__":
    key = jax.random.PRNGKey(0)
    # small shapes: batch=2, 3-channel 64x64 images (stride-32 backbone -> 2x2
    # feature map, then adaptive pool to 14x14).
    images = jax.random.normal(key, (2, 3, 64, 64), jnp.float32)

    raw_params = resnet152_params(KeyGen(0))
    params = prepare_encoder_params(raw_params)    # one-time weight prep

    out = encoder_forward(images, params, encoded_image_size=14)
    out = jax.block_until_ready(out)

    assert out.shape == (2, 14, 14, 2048), out.shape
    assert out.dtype == jnp.float32
    assert bool(jnp.all(jnp.isfinite(out)))
    print("KERNEL_OK")
</pallas_src>

<mosaic_0001>
module attributes {stable_mosaic.version = 11 : i64} {
  func.func @_matmul_bias_kernel(%arg0: i32, %arg1: i32, %arg2: i32, %arg3: memref<512x256xbf16, #tpu.memory_space<vmem>>, %arg4: memref<256x128xbf16, #tpu.memory_space<vmem>>, %arg5: memref<1x128xf32, #tpu.memory_space<vmem>>, %arg6: memref<512x128xbf16, #tpu.memory_space<vmem>>, %arg7: memref<512x128xf32, #tpu.memory_space<vmem>>) attributes {dimension_semantics = [#tpu.dimension_semantics<parallel>, #tpu.dimension_semantics<parallel>, #tpu.dimension_semantics<arbitrary>], iteration_bounds = array<i64: 4, 1, 1>, scalar_prefetch = 0 : i64, scratch_operands = 1 : i64, tpu.core_type = #tpu.core_type<tc>, window_params = [{transform_indices = @transform_0, window_bounds = array<i64: 512, 256>}, {transform_indices = @transform_1, window_bounds = array<i64: 256, 128>}, {transform_indices = @transform_2, window_bounds = array<i64: 1, 128>}, {transform_indices = @transform_3, window_bounds = array<i64: 512, 128>}]} {
    %c0_i32 = arith.constant 0 : i32
    %0 = arith.cmpi eq, %arg2, %c0_i32 : i32
    %1 = arith.extui %0 : i1 to i32
    %c0_i32_0 = arith.constant 0 : i32
    %2 = arith.cmpi ne, %1, %c0_i32_0 : i32
    scf.if %2 {
      %cst_10 = arith.constant 0.000000e+00 : f32
      %12 = vector.broadcast %cst_10 : f32 to vector<512x128xf32>
      %c0_11 = arith.constant 0 : index
      %c0_12 = arith.constant 0 : index
      %13 = vector.load %arg7[%c0_11, %c0_12] : memref<512x128xf32, #tpu.memory_space<vmem>>, vector<512x128xf32>
      tpu.vector_store %arg7[%c0_11, %c0_12], %12 {strides = array<i32>} : memref<512x128xf32, #tpu.memory_space<vmem>>, vector<512x128xf32>,
    } else {
    }
    %c0 = arith.constant 0 : index
    %c0_1 = arith.constant 0 : index
    %3 = vector.load %arg7[%c0, %c0_1] : memref<512x128xf32, #tpu.memory_space<vmem>>, vector<512x128xf32>
    %c0_2 = arith.constant 0 : index
    %c0_3 = arith.constant 0 : index
    %4 = vector.load %arg3[%c0_2, %c0_3] : memref<512x256xbf16, #tpu.memory_space<vmem>>, vector<512x256xbf16>
    %c0_4 = arith.constant 0 : index
    %c0_5 = arith.constant 0 : index
    %5 = vector.load %arg4[%c0_4, %c0_5] : memref<256x128xbf16, #tpu.memory_space<vmem>>, vector<256x128xbf16>
    %cst = arith.constant dense<0.000000e+00> : vector<512x128xf32>
    %6 = tpu.matmul %4, %5, %cst {dimension_numbers = #tpu.dot_dimension_numbers<[1], [0], [0], [1], [0, 0, 1, 1], [], []>} : vector<512x256xbf16>, vector<256x128xbf16>, vector<512x128xf32> -> vector<512x128xf32>
    %7 = arith.addf %3, %6 : vector<512x128xf32>
    %c0_6 = arith.constant 0 : index
    %c0_7 = arith.constant 0 : index
    %8 = vector.load %arg7[%c0_6, %c0_7] : memref<512x128xf32, #tpu.memory_space<vmem>>, vector<512x128xf32>
    tpu.vector_store %arg7[%c0_6, %c0_7], %7 {strides = array<i32>} : memref<512x128xf32, #tpu.memory_space<vmem>>, vector<512x128xf32>,
    %c0_i32_8 = arith.constant 0 : i32
    %9 = arith.cmpi eq, %arg2, %c0_i32_8 : i32
    %10 = arith.extui %9 : i1 to i32
    %c0_i32_9 = arith.constant 0 : i32
    %11 = arith.cmpi ne, %10, %c0_i32_9 : i32
    scf.if %11 {
      %c0_10 = arith.constant 0 : index
      %c0_11 = arith.constant 0 : index
      %12 = vector.load %arg7[%c0_10, %c0_11] : memref<512x128xf32, #tpu.memory_space<vmem>>, vector<512x128xf32>
      %c0_12 = arith.constant 0 : index
      %c0_13 = arith.constant 0 : index
      %13 = vector.load %arg5[%c0_12, %c0_13] : memref<1x128xf32, #tpu.memory_space<vmem>>, vector<1x128xf32>
      %14 = vector.broadcast %13 : vector<1x128xf32> to vector<512x128xf32>
      %15 = arith.addf %12, %14 : vector<512x128xf32>
      %cst_14 = arith.constant 0.000000e+00 : f32
      %16 = vector.broadcast %cst_14 : f32 to vector<512x128xf32>
      %17 = arith.maximumf %15, %16 : vector<512x128xf32>
      %18 = arith.truncf %17 : vector<512x128xf32> to vector<512x128xbf16>
      %c0_15 = arith.constant 0 : index
      %c0_16 = arith.constant 0 : index
      %19 = vector.load %arg6[%c0_15, %c0_16] : memref<512x128xbf16, #tpu.memory_space<vmem>>, vector<512x128xbf16>
      tpu.vector_store %arg6[%c0_15, %c0_16], %18 {strides = array<i32>} : memref<512x128xbf16, #tpu.memory_space<vmem>>, vector<512x128xbf16>,
    } else {
    }
    return
  }
  func.func @transform_0(%arg0: i32, %arg1: i32, %arg2: i32) -> (i32, i32) {
    %c0_i32 = arith.constant 0 : i32
    return %arg0, %arg2 : i32, i32
  }
  func.func @transform_1(%arg0: i32, %arg1: i32, %arg2: i32) -> (i32, i32) {
    %c0_i32 = arith.constant 0 : i32
    return %arg2, %arg1 : i32, i32
  }
  func.func @transform_2(%arg0: i32, %arg1: i32, %arg2: i32) -> (i32, i32) {
    %c0_i32 = arith.constant 0 : i32
    %c0_i32_0 = arith.constant 0 : i32
    return %c0_i32, %arg1 : i32, i32
  }
  func.func @transform_3(%arg0: i32, %arg1: i32, %arg2: i32) -> (i32, i32) {
    %c0_i32 = arith.constant 0 : i32
    return %arg0, %arg1 : i32, i32
  }
}

</mosaic_0001>

<llo_original>
// kernel: conv_im2col.1
$region0: #{conv_im2col.1}
  #allocation0 [shape = 'u32[]', space=smem, size = 0x4, offset = 0x4, fixed_abs, tag = 'smem constant byte address 0x4 - core index']
  #allocation1 [shape = 'u32[72,128]{1,0:T(1,128)}', space=vmem, size = 0x9000, scoped, tag = 'internal scratch']
  #allocation2 [shape = 'f32[512,128]{1,0:T(8,128)}', space=vmem, size = 0x40000, scoped, tag = 'scratch operand']
  %s0 = inlined_call_operand.vmem [shape: bf16[2048,256], index: 0, kind: input, shape index: {}]
  %s1 = inlined_call_operand.vmem [shape: bf16[256,128], index: 1, kind: input, shape index: {}]
  %s2 = inlined_call_operand.vmem [shape: f32[1,128], index: 2, kind: input, shape index: {}]
  %s3 = inlined_call_operand.hbm [shape: bf16[2048,128], index: 3, kind: output, shape index: {}]
  %s4 = sld [smem:[#allocation0]]
  $region53: #{conv_im2col.1} parent=0
    _
  %s6 = ssub.s32 1, %s4
  %s7 = scalar_select 0, %s6, %s4
  $region1: #{conv_im2col.1} parent=0
    #allocation3 [shape = 'u8[262144]{0}', space=vmem, size = 0x40000, scoped, tag = 'output window, operand 0']
    #allocation4 [shape = 's32[2]{0}', space=sflag, size = 0x8, scoped, tag = 'scoped memory for conv_im2col.1']
    %8 = vsyncpa [#allocation4], 0
    %s9 = scalar_lea.sflag [#allocation4], 1
    %10 = vsyncpa %s9, 0
    loop: start=0, step=1, limit=6
    $region2: #{conv_im2col.1} parent=1 // loop_pre_header
      _
    $region3: #{conv_im2col.1} parent=1 // loop_header
      %s12 = sphi 0, %s16
      %p13 = scmp.ge.s32.totalorder %s12, 6
      %s19 = sphi 0, %s38
      %s20 = sphi 0, %s34
      %s21 = sphi 0, %s30
      %s22 = sphi 0, %s19
      %s23 = sphi 0, %s20
      %s24 = sphi 0, %s21
      %s25 = sphi 0, %s22
      %s26 = sphi 0, %s23
      %s27 = sphi 0, %s24
      %s43 = sphi 0, %s45
      %s46 = sphi 0, %s43
      %s47 = sphi 0, %s46
      %s63 = sphi 0, %s47
      %s71 = sphi 0, %s73
      %s74 = sphi 0, %s71
      %s75 = sphi 0, %s74
      %s91 = sphi 0, %s75
      %s97 = sphi 0, %s99
      %s100 = sphi 0, %s97
      %s101 = sphi 0, %s100
      %s117 = sphi 0, %s101
      %s125 = sphi 0, %s127
      %s128 = sphi 0, %s125
      %s129 = sphi 0, %s128
      %s145 = sphi 0, %s129
    $region4: #{conv_im2col.1} parent=1 // loop_header_branch
      %15 = sbr.rel (%p13) target = $region8
    $region5: #{conv_im2col.1} parent=1 // loop_body
      %s17 = ssub.s32 %s12, 1
      %s18 = ssub.s32 %s12, 2
      %s28 = sadd.s32 1, %s21
      %p29 = scmp.ge.s32.totalorder %s28, 1
      %s30 = scalar_select %p29, 0, %s28
      %s31 = sadd.s32 1, %s20
      %s32 = scalar_select %p29, %s31, %s20
      %p33 = scmp.ge.s32.totalorder %s32, 1
      %s34 = scalar_select %p33, 0, %s32
      %s35 = sadd.s32 1, %s19
      %s36 = scalar_select %p33, %s35, %s19
      %p37 = scmp.ge.s32.totalorder %s36, 4
      %s38 = scalar_select %p37, 0, %s36
      %s39 = ssub.s32 %s19, %s38
      %s40 = ssub.s32 %s21, %s30
      %s41 = sor.u32 %s39, %s40
      %p42 = scmp.eq.s32.totalorder %s41, 0
      %s44 = sadd.s32 %s43, 1
      %s45 = scalar_select %p42, %s43, %s44
      %p48 = pneg %p42
      %p49 = scmp.eq.s32.totalorder %s12, 3
      %p50 = por %p48, %p49
      %p51 = scmp.ne.s32.totalorder %s43, %s46
      %p52 = scmp.eq.s32.totalorder %s12, 0
      %p53 = por %p51, %p52
      %p54 = scmp.ne.s32.totalorder %s43, %s46
      %p55 = scmp.eq.s32.totalorder %s17, 3
      %p56 = por %p54, %p55
      %p57 = scmp.ne.s32.totalorder %s46, %s47
      %p58 = scmp.eq.s32.totalorder %s17, 0
      %p59 = por %p57, %p58
      %p60 = scmp.ne.s32.totalorder %s46, %s47
      %p61 = scmp.eq.s32.totalorder %s18, 3
      %p62 = por %p60, %p61
      %p64 = scmp.ne.s32.totalorder %s47, %s63
      %p65 = scmp.eq.s32.totalorder %s18, 0
      %p66 = por %p64, %p65
      %s67 = ssub.s32 %s21, %s30
      %s68 = ssub.s32 %s20, %s34
      %s69 = sor.u32 %s67, %s68
      %p70 = scmp.eq.s32.totalorder %s69, 0
      %s72 = sadd.s32 %s71, 1
      %s73 = scalar_select %p70, %s71, %s72
      %p76 = pneg %p70
      %p77 = scmp.eq.s32.totalorder %s12, 3
      %p78 = por %p76, %p77
      %p79 = scmp.ne.s32.totalorder %s71, %s74
      %p80 = scmp.eq.s32.totalorder %s12, 0
      %p81 = por %p79, %p80
      %p82 = scmp.ne.s32.totalorder %s71, %s74
      %p83 = scmp.eq.s32.totalorder %s17, 3
      %p84 = por %p82, %p83
      %p85 = scmp.ne.s32.totalorder %s74, %s75
      %p86 = scmp.eq.s32.totalorder %s17, 0
      %p87 = por %p85, %p86
      %p88 = scmp.ne.s32.totalorder %s74, %s75
      %p89 = scmp.eq.s32.totalorder %s18, 3
      %p90 = por %p88, %p89
      %p92 = scmp.ne.s32.totalorder %s75, %s91
      %p93 = scmp.eq.s32.totalorder %s18, 0
      %p94 = por %p92, %p93
      %s95 = ssub.s32 %s20, %s34
      %p96 = scmp.eq.s32.totalorder %s95, 0
      %s98 = sadd.s32 %s97, 1
      %s99 = scalar_select %p96, %s97, %s98
      %p102 = pneg %p96
      %p103 = scmp.eq.s32.totalorder %s12, 3
      %p104 = por %p102, %p103
      %p105 = scmp.ne.s32.totalorder %s97, %s100
      %p106 = scmp.eq.s32.totalorder %s12, 0
      %p107 = por %p105, %p106
      %p108 = scmp.ne.s32.totalorder %s97, %s100
      %p109 = scmp.eq.s32.totalorder %s17, 3
      %p110 = por %p108, %p109
      %p111 = scmp.ne.s32.totalorder %s100, %s101
      %p112 = scmp.eq.s32.totalorder %s17, 0
      %p113 = por %p111, %p112
      %p114 = scmp.ne.s32.totalorder %s100, %s101
      %p115 = scmp.eq.s32.totalorder %s18, 3
      %p116 = por %p114, %p115
      %p118 = scmp.ne.s32.totalorder %s101, %s117
      %p119 = scmp.eq.s32.totalorder %s18, 0
      %p120 = por %p118, %p119
      %s121 = ssub.s32 %s19, %s38
      %s122 = ssub.s32 %s20, %s34
      %s123 = sor.u32 %s121, %s122
      %p124 = scmp.eq.s32.totalorder %s123, 0
      %s126 = sadd.s32 %s125, 1
      %s127 = scalar_select %p124, %s125, %s126
      %p130 = pneg %p124
      %p131 = scmp.eq.s32.totalorder %s12, 3
      %p132 = por %p130, %p131
      %p133 = scmp.ne.s32.totalorder %s125, %s128
      %p134 = scmp.eq.s32.totalorder %s12, 0
      %p135 = por %p133, %p134
      %p136 = scmp.ne.s32.totalorder %s125, %s128
      %p137 = scmp.eq.s32.totalorder %s17, 3
      %p138 = por %p136, %p137
      %p139 = scmp.ne.s32.totalorder %s128, %s129
      %p140 = scmp.eq.s32.totalorder %s17, 0
      %p141 = por %p139, %p140
      %p142 = scmp.ne.s32.totalorder %s128, %s129
      %p143 = scmp.eq.s32.totalorder %s18, 3
      %p144 = por %p142, %p143
      %p146 = scmp.ne.s32.totalorder %s129, %s145
      %p147 = scmp.eq.s32.totalorder %s18, 0
      %p148 = por %p146, %p147
      %p149 = scmp.le.s32.totalorder 1, %s12
      %p150 = scmp.lt.s32.totalorder %s12, 5
      %p151 = pnand %p149, %p150
      %p152 = pneg %p151
      // Predicated region
      $region9: #{conv_im2col.1} parent=5 // pred_check
        _
      $region10: #{conv_im2col.1} parent=5 // pred_check_branch
        %154 = sbr.rel (%p151) target = $region12
      $region11: #{conv_im2col.1} parent=5 // pred_region
        %s155 = ssub.s32 %s12, 1
        // Predicated region
        $region13: #{conv_im2col.1} parent=11 // pred_check
          %p156 = pneg %p87
        $region14: #{conv_im2col.1} parent=11 // pred_check_branch
          %158 = sbr.rel (%p156) target = $region16
        $region15: #{conv_im2col.1} parent=11 // pred_region
          %s159 = smul.u32 32, %s24
          %p160 = scmp.lt.s32.totalorder %s159, 31
          %s161 = scalar_select %p160, %s159, 31
          %p162 = scmp.lt.s32.totalorder %s23, 0
          %s163 = scalar_select %p162, %s23, 0
          %s164 = sadd.s32 %s163, %s161
          %s165 = smul.addr %s164, 4
          %s166 = scalar_lea.vmem %s1, %s165
          %s167 = smul.u32 32, %s24
        $region16: #{conv_im2col.1} parent=11 // pred_fallthru
          _
        // Predicated region
        $region17: #{conv_im2col.1} parent=11 // pred_check
          %p168 = pneg %p113
        $region18: #{conv_im2col.1} parent=11 // pred_check_branch
          %170 = sbr.rel (%p168) target = $region20
        $region19: #{conv_im2col.1} parent=11 // pred_region
          %p171 = scmp.lt.s32.totalorder %s23, 0
          %s172 = scalar_select %p171, %s23, 0
          %s173 = scalar_lea.vmem %s2, %s172
        $region20: #{conv_im2col.1} parent=11 // pred_fallthru
          _
      $region12: #{conv_im2col.1} parent=5 // pred_fallthru
        _
      %p174 = scmp.lt.s32.totalorder %s12, 4
      // Predicated region
      $region21: #{conv_im2col.1} parent=5 // pred_check
        %p175 = pneg %p174
      $region22: #{conv_im2col.1} parent=5 // pred_check_branch
        %177 = sbr.rel (%p175) target = $region24
      $region23: #{conv_im2col.1} parent=5 // pred_region
        // Predicated region
        $region25: #{conv_im2col.1} parent=23 // pred_check
          %p178 = pneg %p53
        $region26: #{conv_im2col.1} parent=23 // pred_check_branch
          %180 = sbr.rel (%p178) target = $region28
        $region27: #{conv_im2col.1} parent=23 // pred_region
          %s181 = smul.u32 64, %s19
          %s182 = smul.u32 2, %s21
          %p183 = scmp.lt.s32.totalorder %s181, 255
          %s184 = scalar_select %p183, %s181, 255
          %p185 = scmp.lt.s32.totalorder %s182, 1
          %s186 = scalar_select %p185, %s182, 1
          %s187 = smul.addr %s184, 2
          %s188 = sadd.s32 %s186, %s187
          %s189 = smul.addr %s188, 4
          %s190 = scalar_lea.vmem %s0, %s189
          %s191 = smul.u32 64, %s19
          %s192 = smul.u32 2, %s21
        $region28: #{conv_im2col.1} parent=23 // pred_fallthru
          _
      $region24: #{conv_im2col.1} parent=5 // pred_fallthru
        _
      %p193 = scmp.le.s32.totalorder 1, %s12
      %p194 = scmp.lt.s32.totalorder %s12, 5
      %p195 = pnand %p193, %p194
      %p196 = pneg %p195
      // Predicated region
      $region29: #{conv_im2col.1} parent=5 // pred_check
        _
      $region30: #{conv_im2col.1} parent=5 // pred_check_branch
        %198 = sbr.rel (%p195) target = $region32
      $region31: #{conv_im2col.1} parent=5 // pred_region
        %s199 = ssub.s32 %s12, 1
        %s200 = smul.u32 64, %s22
        %s201 = smul.u32 2, %s24
        %p202 = scmp.lt.s32.totalorder %s200, 255
        %s203 = scalar_select %p202, %s200, 255
        %p204 = scmp.lt.s32.totalorder %s201, 1
        %s205 = scalar_select %p204, %s201, 1
        %s206 = smul.addr %s203, 2
        %s207 = sadd.s32 %s205, %s206
        %s208 = smul.addr %s207, 4
        %s209 = scalar_lea.vmem %s0, %s208
        %p210 = pneg %p59
        %p211 = pneg %p56
        %s212 = smul.u32 32, %s24
        %p213 = scmp.lt.s32.totalorder %s212, 31
        %s214 = scalar_select %p213, %s212, 31
        %p215 = scmp.lt.s32.totalorder %s23, 0
        %s216 = scalar_select %p215, %s23, 0
        %s217 = sadd.s32 %s216, %s214
        %s218 = smul.addr %s217, 4
        %s219 = scalar_lea.vmem %s1, %s218
        %p220 = pneg %p87
        %p221 = pneg %p84
        %p222 = scmp.lt.s32.totalorder %s23, 0
        %s223 = scalar_select %p222, %s23, 0
        %s224 = scalar_lea.vmem %s2, %s223
        %p225 = pneg %p113
        %p226 = pneg %p110
        %p227 = pneg %p141
        %p228 = pneg %p138
        %s229 = sand.u32 %s128, 1
        %s230 = scalar_lea.sflag [#allocation4], %s229
        %s231 = sand.u32 %s128, 1
        %s232 = smul.addr %s231, 256
        %s233 = scalar_lea.vmem [#allocation3], %s232
        %s234 = smul.u32 64, %s22
        %s235 = smul.u32 2, %s24
        %p236 = scmp.lt.s32.totalorder %s234, 255
        %s237 = scalar_select %p236, %s234, 255
        %p238 = scmp.lt.s32.totalorder %s235, 1
        %s239 = scalar_select %p238, %s235, 1
        %s240 = smul.addr %s237, 2
        %s241 = sadd.s32 %s239, %s240
        %s242 = smul.addr %s241, 4
        %s243 = scalar_lea.vmem %s0, %s242
        %s244 = smul.u32 64, %s22
        %s245 = smul.u32 2, %s24
        %s246 = smul.u32 32, %s24
        %p247 = scmp.lt.s32.totalorder %s246, 31
        %s248 = scalar_select %p247, %s246, 31
        %p249 = scmp.lt.s32.totalorder %s23, 0
        %s250 = scalar_select %p249, %s23, 0
        %s251 = sadd.s32 %s250, %s248
        %s252 = smul.addr %s251, 4
        %s253 = scalar_lea.vmem %s1, %s252
        %s254 = smul.u32 32, %s24
        %p255 = scmp.lt.s32.totalorder %s23, 0
        %s256 = scalar_select %p255, %s23, 0
        %s257 = scalar_lea.vmem %s2, %s256
        %s258 = smul.u32 64, %s22
        %p259 = scmp.eq.s32.totalorder %s24, 0
        // Predicated region
        $region33: #{conv_im2col.1} parent=31 // pred_check
          %p260 = pneg %p259
        $region34: #{conv_im2col.1} parent=31 // pred_check_branch
          %262 = sbr.rel (%p260) target = $region36
        $region35: #{conv_im2col.1} parent=31 // pred_region
          %263 = vst [vmem:[#allocation2] sm:$0xff] 0.0
          %264 = vst [vmem:[#allocation2 + $0x8] sm:$0xff] 0.0
          %265 = vst [vmem:[#allocation2 + $0x10] sm:$0xff] 0.0
          %266 = vst [vmem:[#allocation2 + $0x18] sm:$0xff] 0.0
          %267 = vst [vmem:[#allocation2 + $0x20] sm:$0xff] 0.0
          %268 = vst [vmem:[#allocation2 + $0x28] sm:$0xff] 0.0
          %269 = vst [vmem:[#allocation2 + $0x30] sm:$0xff] 0.0
          %270 = vst [vmem:[#allocation2 + $0x38] sm:$0xff] 0.0
          %271 = vst [vmem:[#allocation2 + $0x40] sm:$0xff] 0.0
          %272 = vst [vmem:[#allocation2 + $0x48] sm:$0xff] 0.0
          %273 = vst [vmem:[#allocation2 + $0x50] sm:$0xff] 0.0
          %274 = vst [vmem:[#allocation2 + $0x58] sm:$0xff] 0.0
          %275 = vst [vmem:[#allocation2 + $0x60] sm:$0xff] 0.0
          %276 = vst [vmem:[#allocation2 + $0x68] sm:$0xff] 0.0
          %277 = vst [vmem:[#allocation2 + $0x70] sm:$0xff] 0.0
          %278 = vst [vmem:[#allocation2 + $0x78] sm:$0xff] 0.0
          %279 = vst [vmem:[#allocation2 + $0x80] sm:$0xff] 0.0
          %280 = vst [vmem:[#allocation2 + $0x88] sm:$0xff] 0.0
          %281 = vst [vmem:[#allocation2 + $0x90] sm:$0xff] 0.0
          %282 = vst [vmem:[#allocation2 + $0x98] sm:$0xff] 0.0
          %283 = vst [vmem:[#allocation2 + $0xa0] sm:$0xff] 0.0
          %284 = vst [vmem:[#allocation2 + $0xa8] sm:$0xff] 0.0
          %285 = vst [vmem:[#allocation2 + $0xb0] sm:$0xff] 0.0
          %286 = vst [vmem:[#allocation2 + $0xb8] sm:$0xff] 0.0
          %287 = vst [vmem:[#allocation2 + $0xc0] sm:$0xff] 0.0
          %288 = vst [vmem:[#allocation2 + $0xc8] sm:$0xff] 0.0
          %289 = vst [vmem:[#allocation2 + $0xd0] sm:$0xff] 0.0
          %290 = vst [vmem:[#allocation2 + $0xd8] sm:$0xff] 0.0
          %291 = vst [vmem:[#allocation2 + $0xe0] sm:$0xff] 0.0
          %292 = vst [vmem:[#allocation2 + $0xe8] sm:$0xff] 0.0
          %293 = vst [vmem:[#allocation2 + $0xf0] sm:$0xff] 0.0
          %294 = vst [vmem:[#allocation2 + $0xf8] sm:$0xff] 0.0
          %295 = vst [vmem:[#allocation2 + $0x100] sm:$0xff] 0.0
          %296 = vst [vmem:[#allocation2 + $0x108] sm:$0xff] 0.0
          %297 = vst [vmem:[#allocation2 + $0x110] sm:$0xff] 0.0
          %298 = vst [vmem:[#allocation2 + $0x118] sm:$0xff] 0.0
          %299 = vst [vmem:[#allocation2 + $0x120] sm:$0xff] 0.0
          %300 = vst [vmem:[#allocation2 + $0x128] sm:$0xff] 0.0
          %301 = vst [vmem:[#allocation2 + $0x130] sm:$0xff] 0.0
          %302 = vst [vmem:[#allocation2 + $0x138] sm:$0xff] 0.0
          %303 = vst [vmem:[#allocation2 + $0x140] sm:$0xff] 0.0
          %304 = vst [vmem:[#allocation2 + $0x148] sm:$0xff] 0.0
          %305 = vst [vmem:[#allocation2 + $0x150] sm:$0xff] 0.0
          %306 = vst [vmem:[#allocation2 + $0x158] sm:$0xff] 0.0
          %307 = vst [vmem:[#allocation2 + $0x160] sm:$0xff] 0.0
          %308 = vst [vmem:[#allocation2 + $0x168] sm:$0xff] 0.0
          %309 = vst [vmem:[#allocation2 + $0x170] sm:$0xff] 0.0
          %310 = vst [vmem:[#allocation2 + $0x178] sm:$0xff] 0.0
          %311 = vst [vmem:[#allocation2 + $0x180] sm:$0xff] 0.0
          %312 = vst [vmem:[#allocation2 + $0x188] sm:$0xff] 0.0
          %313 = vst [vmem:[#allocation2 + $0x190] sm:$0xff] 0.0
          %314 = vst [vmem:[#allocation2 + $0x198] sm:$0xff] 0.0
          %315 = vst [vmem:[#allocation2 + $0x1a0] sm:$0xff] 0.0
          %316 = vst [vmem:[#allocation2 + $0x1a8] sm:$0xff] 0.0
          %317 = vst [vmem:[#allocation2 + $0x1b0] sm:$0xff] 0.0
          %318 = vst [vmem:[#allocation2 + $0x1b8] sm:$0xff] 0.0
          %319 = vst [vmem:[#allocation2 + $0x1c0] sm:$0xff] 0.0
          %320 = vst [vmem:[#allocation2 + $0x1c8] sm:$0xff] 0.0
          %321 = vst [vmem:[#allocation2 + $0x1d0] sm:$0xff] 0.0
          %322 = vst [vmem:[#allocation2 + $0x1d8] sm:$0xff] 0.0
          %323 = vst [vmem:[#allocation2 + $0x1e0] sm:$0xff] 0.0
          %324 = vst [vmem:[#allocation2 + $0x1e8] sm:$0xff] 0.0
          %325 = vst [vmem:[#allocation2 + $0x1f0] sm:$0xff] 0.0
          %326 = vst [vmem:[#allocation2 + $0x1f8] sm:$0xff] 0.0
        $region36: #{conv_im2col.1} parent=31 // pred_fallthru
          _
        %v327 = vld [vmem:[#allocation2] sm:$0xff]
        %v328 = vld [vmem:[#allocation2 + $0x8] sm:$0xff]
        %v329 = vld [vmem:[#allocation2 + $0x10] sm:$0xff]
        %v330 = vld [vmem:[#allocation2 + $0x18] sm:$0xff]
        %v331 = vld [vmem:[#allocation2 + $0x20] sm:$0xff]
        %v332 = vld [vmem:[#allocation2 + $0x28] sm:$0xff]
        %v333 = vld [vmem:[#allocation2 + $0x30] sm:$0xff]
        %v334 = vld [vmem:[#allocation2 + $0x38] sm:$0xff]
        %v335 = vld [vmem:[#allocation2 + $0x40] sm:$0xff]
        %v336 = vld [vmem:[#allocation2 + $0x48] sm:$0xff]
        %v337 = vld [vmem:[#allocation2 + $0x50] sm:$0xff]
        %v338 = vld [vmem:[#allocation2 + $0x58] sm:$0xff]
        %v339 = vld [vmem:[#allocation2 + $0x60] sm:$0xff]
        %v340 = vld [vmem:[#allocation2 + $0x68] sm:$0xff]
        %v341 = vld [vmem:[#allocation2 + $0x70] sm:$0xff]
        %v342 = vld [vmem:[#allocation2 + $0x78] sm:$0xff]
        %v343 = vld [vmem:[#allocation2 + $0x80] sm:$0xff]
        %v344 = vld [vmem:[#allocation2 + $0x88] sm:$0xff]
        %v345 = vld [vmem:[#allocation2 + $0x90] sm:$0xff]
        %v346 = vld [vmem:[#allocation2 + $0x98] sm:$0xff]
        %v347 = vld [vmem:[#allocation2 + $0xa0] sm:$0xff]
        %v348 = vld [vmem:[#allocation2 + $0xa8] sm:$0xff]
        %v349 = vld [vmem:[#allocation2 + $0xb0] sm:$0xff]
        %v350 = vld [vmem:[#allocation2 + $0xb8] sm:$0xff]
        %v351 = vld [vmem:[#allocation2 + $0xc0] sm:$0xff]
        %v352 = vld [vmem:[#allocation2 + $0xc8] sm:$0xff]
        %v353 = vld [vmem:[#allocation2 + $0xd0] sm:$0xff]
        %v354 = vld [vmem:[#allocation2 + $0xd8] sm:$0xff]
        %v355 = vld [vmem:[#allocation2 + $0xe0] sm:$0xff]
        %v356 = vld [vmem:[#allocation2 + $0xe8] sm:$0xff]
        %v357 = vld [vmem:[#allocation2 + $0xf0] sm:$0xff]
        %v358 = vld [vmem:[#allocation2 + $0xf8] sm:$0xff]
        %v359 = vld [vmem:[#allocation2 + $0x100] sm:$0xff]
        %v360 = vld [vmem:[#allocation2 + $0x108] sm:$0xff]
        %v361 = vld [vmem:[#allocation2 + $0x110] sm:$0xff]
        %v362 = vld [vmem:[#allocation2 + $0x118] sm:$0xff]
        %v363 = vld [vmem:[#allocation2 + $0x120] sm:$0xff]
        %v364 = vld [vmem:[#allocation2 + $0x128] sm:$0xff]
        %v365 = vld [vmem:[#allocation2 + $0x130] sm:$0xff]
        %v366 = vld [vmem:[#allocation2 + $0x138] sm:$0xff]
        %v367 = vld [vmem:[#allocation2 + $0x140] sm:$0xff]
        %v368 = vld [vmem:[#allocation2 + $0x148] sm:$0xff]
        %v369 = vld [vmem:[#allocation2 + $0x150] sm:$0xff]
        %v370 = vld [vmem:[#allocation2 + $0x158] sm:$0xff]
        %v371 = vld [vmem:[#allocation2 + $0x160] sm:$0xff]
        %v372 = vld [vmem:[#allocation2 + $0x168] sm:$0xff]
        %v373 = vld [vmem:[#allocation2 + $0x170] sm:$0xff]
        %v374 = vld [vmem:[#allocation2 + $0x178] sm:$0xff]
        %v375 = vld [vmem:[#allocation2 + $0x180] sm:$0xff]
        %v376 = vld [vmem:[#allocation2 + $0x188] sm:$0xff]
        %v377 = vld [vmem:[#allocation2 + $0x190] sm:$0xff]
        %v378 = vld [vmem:[#allocation2 + $0x198] sm:$0xff]
        %v379 = vld [vmem:[#allocation2 + $0x1a0] sm:$0xff]
        %v380 = vld [vmem:[#allocation2 + $0x1a8] sm:$0xff]
        %v381 = vld [vmem:[#allocation2 + $0x1b0] sm:$0xff]
        %v382 = vld [vmem:[#allocation2 + $0x1b8] sm:$0xff]
        %v383 = vld [vmem:[#allocation2 + $0x1c0] sm:$0xff]
        %v384 = vld [vmem:[#allocation2 + $0x1c8] sm:$0xff]
        %v385 = vld [vmem:[#allocation2 + $0x1d0] sm:$0xff]
        %v386 = vld [vmem:[#allocation2 + $0x1d8] sm:$0xff]
        %v387 = vld [vmem:[#allocation2 + $0x1e0] sm:$0xff]
        %v388 = vld [vmem:[#allocation2 + $0x1e8] sm:$0xff]
        %v389 = vld [vmem:[#allocation2 + $0x1f0] sm:$0xff]
        %v390 = vld [vmem:[#allocation2 + $0x1f8] sm:$0xff]
        %v391 = vld [vmem:[%s243] sm:$0xff]
        %v392 = vld [vmem:[%s243 + $0x8] sm:$0xff]
        %v393 = vld [vmem:[%s243 + $0x10] sm:$0xff]
        %v394 = vld [vmem:[%s243 + $0x18] sm:$0xff]
        %v395 = vld [vmem:[%s243 + $0x20] sm:$0xff]
        %v396 = vld [vmem:[%s243 + $0x28] sm:$0xff]
        %v397 = vld [vmem:[%s243 + $0x30] sm:$0xff]
        %v398 = vld [vmem:[%s243 + $0x38] sm:$0xff]
        %v399 = vld [vmem:[%s243 + $0x40] sm:$0xff]
        %v400 = vld [vmem:[%s243 + $0x48] sm:$0xff]
        %v401 = vld [vmem:[%s243 + $0x50] sm:$0xff]
        %v402 = vld [vmem:[%s243 + $0x58] sm:$0xff]
        %v403 = vld [vmem:[%s243 + $0x60] sm:$0xff]
        %v404 = vld [vmem:[%s243 + $0x68] sm:$0xff]
        %v405 = vld [vmem:[%s243 + $0x70] sm:$0xff]
        %v406 = vld [vmem:[%s243 + $0x78] sm:$0xff]
        %v407 = vld [vmem:[%s243 + $0x80] sm:$0xff]
        %v408 = vld [vmem:[%s243 + $0x88] sm:$0xff]
        %v409 = vld [vmem:[%s243 + $0x90] sm:$0xff]
        %v410 = vld [vmem:[%s243 + $0x98] sm:$0xff]
        %v411 = vld [vmem:[%s243 + $0xa0] sm:$0xff]
        %v412 = vld [vmem:[%s243 + $0xa8] sm:$0xff]
        %v413 = vld [vmem:[%s243 + $0xb0] sm:$0xff]
        %v414 = vld [vmem:[%s243 + $0xb8] sm:$0xff]
        %v415 = vld [vmem:[%s243 + $0xc0] sm:$0xff]
        %v416 = vld [vmem:[%s243 + $0xc8] sm:$0xff]
        %v417 = vld [vmem:[%s243 + $0xd0] sm:$0xff]
        %v418 = vld [vmem:[%s243 + $0xd8] sm:$0xff]
        %v419 = vld [vmem:[%s243 + $0xe0] sm:$0xff]
        %v420 = vld [vmem:[%s243 + $0xe8] sm:$0xff]
        %v421 = vld [vmem:[%s243 + $0xf0] sm:$0xff]
        %v422 = vld [vmem:[%s243 + $0xf8] sm:$0xff]
        %v423 = vld [vmem:[%s243 + $0x100] sm:$0xff]
        %v424 = vld [vmem:[%s243 + $0x108] sm:$0xff]
        %v425 = vld [vmem:[%s243 + $0x110] sm:$0xff]
        %v426 = vld [vmem:[%s243 + $0x118] sm:$0xff]
        %v427 = vld [vmem:[%s243 + $0x120] sm:$0xff]
        %v428 = vld [vmem:[%s243 + $0x128] sm:$0xff]
        %v429 = vld [vmem:[%s243 + $0x130] sm:$0xff]
        %v430 = vld [vmem:[%s243 + $0x138] sm:$0xff]
        %v431 = vld [vmem:[%s243 + $0x140] sm:$0xff]
        %v432 = vld [vmem:[%s243 + $0x148] sm:$0xff]
        %v433 = vld [vmem:[%s243 + $0x150] sm:$0xff]
        %v434 = vld [vmem:[%s243 + $0x158] sm:$0xff]
        %v435 = vld [vmem:[%s243 + $0x160] sm:$0xff]
        %v436 = vld [vmem:[%s243 + $0x168] sm:$0xff]
        %v437 = vld [vmem:[%s243 + $0x170] sm:$0xff]
        %v438 = vld [vmem:[%s243 + $0x178] sm:$0xff]
        %v439 = vld [vmem:[%s243 + $0x180] sm:$0xff]
        %v440 = vld [vmem:[%s243 + $0x188] sm:$0xff]
        %v441 = vld [vmem:[%s243 + $0x190] sm:$0xff]
        %v442 = vld [vmem:[%s243 + $0x198] sm:$0xff]
        %v443 = vld [vmem:[%s243 + $0x1a0] sm:$0xff]
        %v444 = vld [vmem:[%s243 + $0x1a8] sm:$0xff]
        %v445 = vld [vmem:[%s243 + $0x1b0] sm:$0xff]
        %v446 = vld [vmem:[%s243 + $0x1b8] sm:$0xff]
        %v447 = vld [vmem:[%s243 + $0x1c0] sm:$0xff]
        %v448 = vld [vmem:[%s243 + $0x1c8] sm:$0xff]
        %v449 = vld [vmem:[%s243 + $0x1d0] sm:$0xff]
        %v450 = vld [vmem:[%s243 + $0x1d8] sm:$0xff]
        %v451 = vld [vmem:[%s243 + $0x1e0] sm:$0xff]
        %v452 = vld [vmem:[%s243 + $0x1e8] sm:$0xff]
        %v453 = vld [vmem:[%s243 + $0x1f0] sm:$0xff]
        %v454 = vld [vmem:[%s243 + $0x1f8] sm:$0xff]
        %v455 = vld [vmem:[%s253] sm:$0xf]
        %v456 = vld [vmem:[%s253 + $0x4] sm:$0xf]
        %v457 = vld [vmem:[%s253 + $0x8] sm:$0xf]
        %v458 = vld [vmem:[%s253 + $0xc] sm:$0xf]
        %v459 = vld [vmem:[%s253 + $0x10] sm:$0xf]
        %v460 = vld [vmem:[%s253 + $0x14] sm:$0xf]
        %v461 = vld [vmem:[%s253 + $0x18] sm:$0xf]
        %v462 = vld [vmem:[%s253 + $0x1c] sm:$0xf]
        %v463 = vld [vmem:[%s253 + $0x20] sm:$0xf]
        %v464 = vld [vmem:[%s253 + $0x24] sm:$0xf]
        %v465 = vld [vmem:[%s253 + $0x28] sm:$0xf]
        %v466 = vld [vmem:[%s253 + $0x2c] sm:$0xf]
        %v467 = vld [vmem:[%s253 + $0x30] sm:$0xf]
        %v468 = vld [vmem:[%s253 + $0x34] sm:$0xf]
        %v469 = vld [vmem:[%s253 + $0x38] sm:$0xf]
        %v470 = vld [vmem:[%s253 + $0x3c] sm:$0xf]
        %v471 = vld [vmem:[%s253 + $0x40] sm:$0xf]
        %v472 = vld [vmem:[%s253 + $0x44] sm:$0xf]
        %v473 = vld [vmem:[%s253 + $0x48] sm:$0xf]
        %v474 = vld [vmem:[%s253 + $0x4c] sm:$0xf]
        %v475 = vld [vmem:[%s253 + $0x50] sm:$0xf]
        %v476 = vld [vmem:[%s253 + $0x54] sm:$0xf]
        %v477 = vld [vmem:[%s253 + $0x58] sm:$0xf]
        %v478 = vld [vmem:[%s253 + $0x5c] sm:$0xf]
        %v479 = vld [vmem:[%s253 + $0x60] sm:$0xf]
        %v480 = vld [vmem:[%s253 + $0x64] sm:$0xf]
        %v481 = vld [vmem:[%s253 + $0x68] sm:$0xf]
        %v482 = vld [vmem:[%s253 + $0x6c] sm:$0xf]
        %v483 = vld [vmem:[%s253 + $0x70] sm:$0xf]
        %v484 = vld [vmem:[%s253 + $0x74] sm:$0xf]
        %v485 = vld [vmem:[%s253 + $0x78] sm:$0xf]
        %v486 = vld [vmem:[%s253 + $0x7c] sm:$0xf]
        %v551 = vunpack.c.l.b16 %v391
        %v552 = vunpack.c.h.b16 %v391
        %v553 = vunpack.c.l.b16 %v392
        %v554 = vunpack.c.h.b16 %v392
        %v555 = vunpack.c.l.b16 %v393
        %v556 = vunpack.c.h.b16 %v393
        %v557 = vunpack.c.l.b16 %v394
        %v558 = vunpack.c.h.b16 %v394
        %v559 = vunpack.c.l.b16 %v395
        %v560 = vunpack.c.h.b16 %v395
        %v561 = vunpack.c.l.b16 %v396
        %v562 = vunpack.c.h.b16 %v396
        %v563 = vunpack.c.l.b16 %v397
        %v564 = vunpack.c.h.b16 %v397
        %v565 = vunpack.c.l.b16 %v398
        %v566 = vunpack.c.h.b16 %v398
        %v567 = vunpack.c.l.b16 %v399
        %v568 = vunpack.c.h.b16 %v399
        %v569 = vunpack.c.l.b16 %v400
        %v570 = vunpack.c.h.b16 %v400
        %v571 = vunpack.c.l.b16 %v401
        %v572 = vunpack.c.h.b16 %v401
        %v573 = vunpack.c.l.b16 %v402
        %v574 = vunpack.c.h.b16 %v402
        %v575 = vunpack.c.l.b16 %v403
        %v576 = vunpack.c.h.b16 %v403
        %v577 = vunpack.c.l.b16 %v404
        %v578 = vunpack.c.h.b16 %v404
        %v579 = vunpack.c.l.b16 %v405
        %v580 = vunpack.c.h.b16 %v405
        %v581 = vunpack.c.l.b16 %v406
        %v582 = vunpack.c.h.b16 %v406
        %v583 = vunpack.c.l.b16 %v407
        %v584 = vunpack.c.h.b16 %v407
        %v585 = vunpack.c.l.b16 %v408
        %v586 = vunpack.c.h.b16 %v408
        %v587 = vunpack.c.l.b16 %v409
        %v588 = vunpack.c.h.b16 %v409
        %v589 = vunpack.c.l.b16 %v410
        %v590 = vunpack.c.h.b16 %v410
        %v591 = vunpack.c.l.b16 %v411
        %v592 = vunpack.c.h.b16 %v411
        %v593 = vunpack.c.l.b16 %v412
        %v594 = vunpack.c.h.b16 %v412
        %v595 = vunpack.c.l.b16 %v413
        %v596 = vunpack.c.h.b16 %v413
        %v597 = vunpack.c.l.b16 %v414
        %v598 = vunpack.c.h.b16 %v414
        %v599 = vunpack.c.l.b16 %v415
        %v600 = vunpack.c.h.b16 %v415
        %v601 = vunpack.c.l.b16 %v416
        %v602 = vunpack.c.h.b16 %v416
        %v603 = vunpack.c.l.b16 %v417
        %v604 = vunpack.c.h.b16 %v417
        %v605 = vunpack.c.l.b16 %v418
        %v606 = vunpack.c.h.b16 %v418
        %v607 = vunpack.c.l.b16 %v419
        %v608 = vunpack.c.h.b16 %v419
        %v609 = vunpack.c.l.b16 %v420
        %v610 = vunpack.c.h.b16 %v420
        %v611 = vunpack.c.l.b16 %v421
        %v612 = vunpack.c.h.b16 %v421
        %v613 = vunpack.c.l.b16 %v422
        %v614 = vunpack.c.h.b16 %v422
        %v615 = vunpack.c.l.b16 %v423
        %v616 = vunpack.c.h.b16 %v423
        %v617 = vunpack.c.l.b16 %v424
        %v618 = vunpack.c.h.b16 %v424
        %v619 = vunpack.c.l.b16 %v425
        %v620 = vunpack.c.h.b16 %v425
        %v621 = vunpack.c.l.b16 %v426
        %v622 = vunpack.c.h.b16 %v426
        %v623 = vunpack.c.l.b16 %v427
        %v624 = vunpack.c.h.b16 %v427
        %v625 = vunpack.c.l.b16 %v428
        %v626 = vunpack.c.h.b16 %v428
        %v627 = vunpack.c.l.b16 %v429
        %v628 = vunpack.c.h.b16 %v429
        %v629 = vunpack.c.l.b16 %v430
        %v630 = vunpack.c.h.b16 %v430
        %v631 = vunpack.c.l.b16 %v431
        %v632 = vunpack.c.h.b16 %v431
        %v633 = vunpack.c.l.b16 %v432
        %v634 = vunpack.c.h.b16 %v432
        %v635 = vunpack.c.l.b16 %v433
        %v636 = vunpack.c.h.b16 %v433
        %v637 = vunpack.c.l.b16 %v434
        %v638 = vunpack.c.h.b16 %v434
        %v639 = vunpack.c.l.b16 %v435
        %v640 = vunpack.c.h.b16 %v435
        %v641 = vunpack.c.l.b16 %v436
        %v642 = vunpack.c.h.b16 %v436
        %v643 = vunpack.c.l.b16 %v437
        %v644 = vunpack.c.h.b16 %v437
        %v645 = vunpack.c.l.b16 %v438
        %v646 = vunpack.c.h.b16 %v438
        %v647 = vunpack.c.l.b16 %v439
        %v648 = vunpack.c.h.b16 %v439
        %v649 = vunpack.c.l.b16 %v440
        %v650 = vunpack.c.h.b16 %v440
        %v651 = vunpack.c.l.b16 %v441
        %v652 = vunpack.c.h.b16 %v441
        %v653 = vunpack.c.l.b16 %v442
        %v654 = vunpack.c.h.b16 %v442
        %v655 = vunpack.c.l.b16 %v443
        %v656 = vunpack.c.h.b16 %v443
        %v657 = vunpack.c.l.b16 %v444
        %v658 = vunpack.c.h.b16 %v444
        %v659 = vunpack.c.l.b16 %v445
        %v660 = vunpack.c.h.b16 %v445
        %v661 = vunpack.c.l.b16 %v446
        %v662 = vunpack.c.h.b16 %v446
        %v663 = vunpack.c.l.b16 %v447
        %v664 = vunpack.c.h.b16 %v447
        %v665 = vunpack.c.l.b16 %v448
        %v666 = vunpack.c.h.b16 %v448
        %v667 = vunpack.c.l.b16 %v449
        %v668 = vunpack.c.h.b16 %v449
        %v669 = vunpack.c.l.b16 %v450
        %v670 = vunpack.c.h.b16 %v450
        %v671 = vunpack.c.l.b16 %v451
        %v672 = vunpack.c.h.b16 %v451
        %v673 = vunpack.c.l.b16 %v452
        %v674 = vunpack.c.h.b16 %v452
        %v675 = vunpack.c.l.b16 %v453
        %v676 = vunpack.c.h.b16 %v453
        %v677 = vunpack.c.l.b16 %v454
        %v678 = vunpack.c.h.b16 %v454
        %v679 = vpack.c.b16 %v553, %v551
        %v680 = vpack.c.b16 %v554, %v552
        %v681 = vpack.c.b16 %v557, %v555
        %v682 = vpack.c.b16 %v558, %v556
        %v683 = vpack.c.b16 %v561, %v559
        %v684 = vpack.c.b16 %v562, %v560
        %v685 = vpack.c.b16 %v565, %v563
        %v686 = vpack.c.b16 %v566, %v564
        %v687 = vpack.c.b16 %v569, %v567
        %v688 = vpack.c.b16 %v570, %v568
        %v689 = vpack.c.b16 %v573, %v571
        %v690 = vpack.c.b16 %v574, %v572
        %v691 = vpack.c.b16 %v577, %v575
        %v692 = vpack.c.b16 %v578, %v576
        %v693 = vpack.c.b16 %v581, %v579
        %v694 = vpack.c.b16 %v582, %v580
        %v695 = vpack.c.b16 %v585, %v583
        %v696 = vpack.c.b16 %v586, %v584
        %v697 = vpack.c.b16 %v589, %v587
        %v698 = vpack.c.b16 %v590, %v588
        %v699 = vpack.c.b16 %v593, %v591
        %v700 = vpack.c.b16 %v594, %v592
        %v701 = vpack.c.b16 %v597, %v595
        %v702 = vpack.c.b16 %v598, %v596
        %v703 = vpack.c.b16 %v601, %v599
        %v704 = vpack.c.b16 %v602, %v600
        %v705 = vpack.c.b16 %v605, %v603
        %v706 = vpack.c.b16 %v606, %v604
        %v707 = vpack.c.b16 %v609, %v607
        %v708 = vpack.c.b16 %v610, %v608
        %v709 = vpack.c.b16 %v613, %v611
        %v710 = vpack.c.b16 %v614, %v612
        %v711 = vpack.c.b16 %v617, %v615
        %v712 = vpack.c.b16 %v618, %v616
        %v713 = vpack.c.b16 %v621, %v619
        %v714 = vpack.c.b16 %v622, %v620
        %v715 = vpack.c.b16 %v625, %v623
        %v716 = vpack.c.b16 %v626, %v624
        %v717 = vpack.c.b16 %v629, %v627
        %v718 = vpack.c.b16 %v630, %v628
        %v719 = vpack.c.b16 %v633, %v631
        %v720 = vpack.c.b16 %v634, %v632
        %v721 = vpack.c.b16 %v637, %v635
        %v722 = vpack.c.b16 %v638, %v636
        %v723 = vpack.c.b16 %v641, %v639
        %v724 = vpack.c.b16 %v642, %v640
        %v725 = vpack.c.b16 %v645, %v643
        %v726 = vpack.c.b16 %v646, %v644
        %v727 = vpack.c.b16 %v649, %v647
        %v728 = vpack.c.b16 %v650, %v648
        %v729 = vpack.c.b16 %v653, %v651
        %v730 = vpack.c.b16 %v654, %v652
        %v731 = vpack.c.b16 %v657, %v655
        %v732 = vpack.c.b16 %v658, %v656
        %v733 = vpack.c.b16 %v661, %v659
        %v734 = vpack.c.b16 %v662, %v660
        %v735 = vpack.c.b16 %v665, %v663
        %v736 = vpack.c.b16 %v666, %v664
        %v737 = vpack.c.b16 %v669, %v667
        %v738 = vpack.c.b16 %v670, %v668
        %v739 = vpack.c.b16 %v673, %v671
        %v740 = vpack.c.b16 %v674, %v672
        %v741 = vpack.c.b16 %v677, %v675
        %v742 = vpack.c.b16 %v678, %v676
        %v839 = vunpack.c.l.b16 %v455
        %v840 = vunpack.c.l.b16 %v456
        %v841 = vunpack.c.l.b16 %v457
        %v842 = vunpack.c.l.b16 %v458
        %v843 = vunpack.c.l.b16 %v459
        %v844 = vunpack.c.l.b16 %v460
        %v845 = vunpack.c.l.b16 %v461
        %v846 = vunpack.c.l.b16 %v462
        %v847 = vunpack.c.l.b16 %v463
        %v848 = vunpack.c.l.b16 %v464
        %v849 = vunpack.c.l.b16 %v465
        %v850 = vunpack.c.l.b16 %v466
        %v851 = vunpack.c.l.b16 %v467
        %v852 = vunpack.c.l.b16 %v468
        %v853 = vunpack.c.l.b16 %v469
        %v854 = vunpack.c.l.b16 %v470
        %v855 = vunpack.c.l.b16 %v471
        %v856 = vunpack.c.l.b16 %v472
        %v857 = vunpack.c.l.b16 %v473
        %v858 = vunpack.c.l.b16 %v474
        %v859 = vunpack.c.l.b16 %v475
        %v860 = vunpack.c.l.b16 %v476
        %v861 = vunpack.c.l.b16 %v477
        %v862 = vunpack.c.l.b16 %v478
        %v863 = vunpack.c.l.b16 %v479
        %v864 = vunpack.c.l.b16 %v480
        %v865 = vunpack.c.l.b16 %v481
        %v866 = vunpack.c.l.b16 %v482
        %v867 = vunpack.c.l.b16 %v483
        %v868 = vunpack.c.l.b16 %v484
        %v869 = vunpack.c.l.b16 %v485
        %v870 = vunpack.c.l.b16 %v486
        %v871 = vpack.c.b16 %v840, %v839
        %v872 = vpack.c.b16 %v842, %v841
        %v873 = vpack.c.b16 %v844, %v843
        %v874 = vpack.c.b16 %v846, %v845
        %v875 = vpack.c.b16 %v848, %v847
        %v876 = vpack.c.b16 %v850, %v849
        %v877 = vpack.c.b16 %v852, %v851
        %v878 = vpack.c.b16 %v854, %v853
        %v879 = vpack.c.b16 %v856, %v855
        %v880 = vpack.c.b16 %v858, %v857
        %v881 = vpack.c.b16 %v860, %v859
        %v882 = vpack.c.b16 %v862, %v861
        %v883 = vpack.c.b16 %v864, %v863
        %v884 = vpack.c.b16 %v866, %v865
        %v885 = vpack.c.b16 %v868, %v867
        %v886 = vpack.c.b16 %v870, %v869
        %903 = vmatpush.bf16.msra.mxu0 %v878
        %904 = vmatpush.bf16.msra.mxu0 %v877
        %905 = vmatpush.bf16.msra.mxu0 %v876
        %906 = vmatpush.bf16.msra.mxu0 %v875
        %907 = vmatpush.bf16.msra.mxu0 %v874
        %908 = vmatpush.bf16.msra.mxu0 %v873
        %909 = vmatpush.bf16.msra.mxu0 %v872
        %910 = vmatpush.bf16.msra.mxu0 %v871
        %911 = vmatmul.bf16.gmra.mxu0 %v679
        %v912 = vpop.f32.mrf.mxu0
        %v913 = vadd.f32 0.0, %v912
        %v914 = vpop.f32.mrf.mxu0
        %v915 = vadd.f32 0.0, %v914
        %916 = vmatmul.bf16.gmra.mxu0 %v681
        %v917 = vpop.f32.mrf.mxu0
        %v918 = vadd.f32 0.0, %v917
        %v919 = vpop.f32.mrf.mxu0
        %v920 = vadd.f32 0.0, %v919
        %921 = vmatmul.bf16.gmra.mxu0 %v683
        %v922 = vpop.f32.mrf.mxu0
        %v923 = vadd.f32 0.0, %v922
        %v924 = vpop.f32.mrf.mxu0
        %v925 = vadd.f32 0.0, %v924
        %926 = vmatmul.bf16.gmra.mxu0 %v685
        %v927 = vpop.f32.mrf.mxu0
        %v928 = vadd.f32 0.0, %v927
        %v929 = vpop.f32.mrf.mxu0
        %v930 = vadd.f32 0.0, %v929
        %931 = vmatmul.bf16.gmra.mxu0 %v687
        %v932 = vpop.f32.mrf.mxu0
        %v933 = vadd.f32 0.0, %v932
        %v934 = vpop.f32.mrf.mxu0
        %v935 = vadd.f32 0.0, %v934
        %936 = vmatmul.bf16.gmra.mxu0 %v689
        %v937 = vpop.f32.mrf.mxu0
        %v938 = vadd.f32 0.0, %v937
        %v939 = vpop.f32.mrf.mxu0
        %v940 = vadd.f32 0.0, %v939
        %941 = vmatmul.bf16.gmra.mxu0 %v691
        %v942 = vpop.f32.mrf.mxu0
        %v943 = vadd.f32 0.0, %v942
        %v944 = vpop.f32.mrf.mxu0
        %v945 = vadd.f32 0.0, %v944
        %946 = vmatmul.bf16.gmra.mxu0 %v693
        %v947 = vpop.f32.mrf.mxu0
        %v948 = vadd.f32 0.0, %v947
        %v949 = vpop.f32.mrf.mxu0
        %v950 = vadd.f32 0.0, %v949
        %951 = vmatmul.bf16.gmra.mxu0 %v695
        %v952 = vpop.f32.mrf.mxu0
        %v953 = vadd.f32 0.0, %v952
        %v954 = vpop.f32.mrf.mxu0
        %v955 = vadd.f32 0.0, %v954
        %956 = vmatmul.bf16.gmra.mxu0 %v697
        %v957 = vpop.f32.mrf.mxu0
        %v958 = vadd.f32 0.0, %v957
        %v959 = vpop.f32.mrf.mxu0
        %v960 = vadd.f32 0.0, %v959
        %961 = vmatmul.bf16.gmra.mxu0 %v699
        %v962 = vpop.f32.mrf.mxu0
        %v963 = vadd.f32 0.0, %v962
        %v964 = vpop.f32.mrf.mxu0
        %v965 = vadd.f32 0.0, %v964
        %966 = vmatmul.bf16.gmra.mxu0 %v701
        %v967 = vpop.f32.mrf.mxu0
        %v968 = vadd.f32 0.0, %v967
        %v969 = vpop.f32.mrf.mxu0
        %v970 = vadd.f32 0.0, %v969
        %971 = vmatmul.bf16.gmra.mxu0 %v703
        %v972 = vpop.f32.mrf.mxu0
        %v973 = vadd.f32 0.0, %v972
        %v974 = vpop.f32.mrf.mxu0
        %v975 = vadd.f32 0.0, %v974
        %976 = vmatmul.bf16.gmra.mxu0 %v705
        %v977 = vpop.f32.mrf.mxu0
        %v978 = vadd.f32 0.0, %v977
        %v979 = vpop.f32.mrf.mxu0
        %v980 = vadd.f32 0.0, %v979
        %981 = vmatmul.bf16.gmra.mxu0 %v707
        %v982 = vpop.f32.mrf.mxu0
        %v983 = vadd.f32 0.0, %v982
        %v984 = vpop.f32.mrf.mxu0
        %v985 = vadd.f32 0.0, %v984
        %986 = vmatmul.bf16.gmra.mxu0 %v709
        %v987 = vpop.f32.mrf.mxu0
        %v988 = vadd.f32 0.0, %v987
        %v989 = vpop.f32.mrf.mxu0
        %v990 = vadd.f32 0.0, %v989
        %991 = vmatmul.bf16.gmra.mxu0 %v711
        %v992 = vpop.f32.mrf.mxu0
        %v993 = vadd.f32 0.0, %v992
        %v994 = vpop.f32.mrf.mxu0
        %v995 = vadd.f32 0.0, %v994
        %996 = vmatmul.bf16.gmra.mxu0 %v713
        %v997 = vpop.f32.mrf.mxu0
        %v998 = vadd.f32 0.0, %v997
        %v999 = vpop.f32.mrf.mxu0
        %v1000 = vadd.f32 0.0, %v999
        %1001 = vmatmul.bf16.gmra.mxu0 %v715
        %v1002 = vpop.f32.mrf.mxu0
        %v1003 = vadd.f32 0.0, %v1002
        %v1004 = vpop.f32.mrf.mxu0
        %v1005 = vadd.f32 0.0, %v1004
        %1006 = vmatmul.bf16.gmra.mxu0 %v717
        %v1007 = vpop.f32.mrf.mxu0
        %v1008 = vadd.f32 0.0, %v1007
        %v1009 = vpop.f32.mrf.mxu0
        %v1010 = vadd.f32 0.0, %v1009
        %1011 = vmatmul.bf16.gmra.mxu0 %v719
        %v1012 = vpop.f32.mrf.mxu0
        %v1013 = vadd.f32 0.0, %v1012
        %v1014 = vpop.f32.mrf.mxu0
        %v1015 = vadd.f32 0.0, %v1014
        %1016 = vmatmul.bf16.gmra.mxu0 %v721
        %v1017 = vpop.f32.mrf.mxu0
        %v1018 = vadd.f32 0.0, %v1017
        %v1019 = vpop.f32.mrf.mxu0
        %v1020 = vadd.f32 0.0, %v1019
        %1021 = vmatmul.bf16.gmra.mxu0 %v723
        %v1022 = vpop.f32.mrf.mxu0
        %v1023 = vadd.f32 0.0, %v1022
        %v1024 = vpop.f32.mrf.mxu0
        %v1025 = vadd.f32 0.0, %v1024
        %1026 = vmatmul.bf16.gmra.mxu0 %v725
        %v1027 = vpop.f32.mrf.mxu0
        %v1028 = vadd.f32 0.0, %v1027
        %v1029 = vpop.f32.mrf.mxu0
        %v1030 = vadd.f32 0.0, %v1029
        %1031 = vmatmul.bf16.gmra.mxu0 %v727
        %v1032 = vpop.f32.mrf.mxu0
        %v1033 = vadd.f32 0.0, %v1032
        %v1034 = vpop.f32.mrf.mxu0
        %v1035 = vadd.f32 0.0, %v1034
        %1036 = vmatmul.bf16.gmra.mxu0 %v729
        %v1037 = vpop.f32.mrf.mxu0
        %v1038 = vadd.f32 0.0, %v1037
        %v1039 = vpop.f32.mrf.mxu0
        %v1040 = vadd.f32 0.0, %v1039
        %1041 = vmatmul.bf16.gmra.mxu0 %v731
        %v1042 = vpop.f32.mrf.mxu0
        %v1043 = vadd.f32 0.0, %v1042
        %v1044 = vpop.f32.mrf.mxu0
        %v1045 = vadd.f32 0.0, %v1044
        %1046 = vmatmul.bf16.gmra.mxu0 %v733
        %v1047 = vpop.f32.mrf.mxu0
        %v1048 = vadd.f32 0.0, %v1047
        %v1049 = vpop.f32.mrf.mxu0
        %v1050 = vadd.f32 0.0, %v1049
        %1051 = vmatmul.bf16.gmra.mxu0 %v735
        %v1052 = vpop.f32.mrf.mxu0
        %v1053 = vadd.f32 0.0, %v1052
        %v1054 = vpop.f32.mrf.mxu0
        %v1055 = vadd.f32 0.0, %v1054
        %1056 = vmatmul.bf16.gmra.mxu0 %v737
        %v1057 = vpop.f32.mrf.mxu0
        %v1058 = vadd.f32 0.0, %v1057
        %v1059 = vpop.f32.mrf.mxu0
        %v1060 = vadd.f32 0.0, %v1059
        %1061 = vmatmul.bf16.gmra.mxu0 %v739
        %v1062 = vpop.f32.mrf.mxu0
        %v1063 = vadd.f32 0.0, %v1062
        %v1064 = vpop.f32.mrf.mxu0
        %v1065 = vadd.f32 0.0, %v1064
        %1066 = vmatmul.bf16.gmra.mxu0 %v741
        %v1067 = vpop.f32.mrf.mxu0
        %v1068 = vadd.f32 0.0, %v1067
        %v1069 = vpop.f32.mrf.mxu0
        %v1070 = vadd.f32 0.0, %v1069
        %1071 = vdwg.mxu0
        %1072 = vmatpush.bf16.msra.mxu0 %v886
        %1073 = vmatpush.bf16.msra.mxu0 %v885
        %1074 = vmatpush.bf16.msra.mxu0 %v884
        %1075 = vmatpush.bf16.msra.mxu0 %v883
        %1076 = vmatpush.bf16.msra.mxu0 %v882
        %1077 = vmatpush.bf16.msra.mxu0 %v881
        %1078 = vmatpush.bf16.msra.mxu0 %v880
        %1079 = vmatpush.bf16.msra.mxu0 %v879
        %1080 = vmatmul.bf16.gmra.mxu0 %v680
        %v1081 = vpop.f32.mrf.mxu0
        %v1082 = vadd.f32 %v913, %v1081
        %v1083 = vpop.f32.mrf.mxu0
        %v1084 = vadd.f32 %v915, %v1083
        %1085 = vmatmul.bf16.gmra.mxu0 %v682
        %v1086 = vpop.f32.mrf.mxu0
        %v1087 = vadd.f32 %v918, %v1086
        %v1088 = vpop.f32.mrf.mxu0
        %v1089 = vadd.f32 %v920, %v1088
        %1090 = vmatmul.bf16.gmra.mxu0 %v684
        %v1091 = vpop.f32.mrf.mxu0
        %v1092 = vadd.f32 %v923, %v1091
        %v1093 = vpop.f32.mrf.mxu0
        %v1094 = vadd.f32 %v925, %v1093
        %1095 = vmatmul.bf16.gmra.mxu0 %v686
        %v1096 = vpop.f32.mrf.mxu0
        %v1097 = vadd.f32 %v928, %v1096
        %v1098 = vpop.f32.mrf.mxu0
        %v1099 = vadd.f32 %v930, %v1098
        %1100 = vmatmul.bf16.gmra.mxu0 %v688
        %v1101 = vpop.f32.mrf.mxu0
        %v1102 = vadd.f32 %v933, %v1101
        %v1103 = vpop.f32.mrf.mxu0
        %v1104 = vadd.f32 %v935, %v1103
        %1105 = vmatmul.bf16.gmra.mxu0 %v690
        %v1106 = vpop.f32.mrf.mxu0
        %v1107 = vadd.f32 %v938, %v1106
        %v1108 = vpop.f32.mrf.mxu0
        %v1109 = vadd.f32 %v940, %v1108
        %1110 = vmatmul.bf16.gmra.mxu0 %v692
        %v1111 = vpop.f32.mrf.mxu0
        %v1112 = vadd.f32 %v943, %v1111
        %v1113 = vpop.f32.mrf.mxu0
        %v1114 = vadd.f32 %v945, %v1113
        %1115 = vmatmul.bf16.gmra.mxu0 %v694
        %v1116 = vpop.f32.mrf.mxu0
        %v1117 = vadd.f32 %v948, %v1116
        %v1118 = vpop.f32.mrf.mxu0
        %v1119 = vadd.f32 %v950, %v1118
        %1120 = vmatmul.bf16.gmra.mxu0 %v696
        %v1121 = vpop.f32.mrf.mxu0
        %v1122 = vadd.f32 %v953, %v1121
        %v1123 = vpop.f32.mrf.mxu0
        %v1124 = vadd.f32 %v955, %v1123
        %1125 = vmatmul.bf16.gmra.mxu0 %v698
        %v1126 = vpop.f32.mrf.mxu0
        %v1127 = vadd.f32 %v958, %v1126
        %v1128 = vpop.f32.mrf.mxu0
        %v1129 = vadd.f32 %v960, %v1128
        %1130 = vmatmul.bf16.gmra.mxu0 %v700
        %v1131 = vpop.f32.mrf.mxu0
        %v1132 = vadd.f32 %v963, %v1131
        %v1133 = vpop.f32.mrf.mxu0
        %v1134 = vadd.f32 %v965, %v1133
        %1135 = vmatmul.bf16.gmra.mxu0 %v702
        %v1136 = vpop.f32.mrf.mxu0
        %v1137 = vadd.f32 %v968, %v1136
        %v1138 = vpop.f32.mrf.mxu0
        %v1139 = vadd.f32 %v970, %v1138
        %1140 = vmatmul.bf16.gmra.mxu0 %v704
        %v1141 = vpop.f32.mrf.mxu0
        %v1142 = vadd.f32 %v973, %v1141
        %v1143 = vpop.f32.mrf.mxu0
        %v1144 = vadd.f32 %v975, %v1143
        %1145 = vmatmul.bf16.gmra.mxu0 %v706
        %v1146 = vpop.f32.mrf.mxu0
        %v1147 = vadd.f32 %v978, %v1146
        %v1148 = vpop.f32.mrf.mxu0
        %v1149 = vadd.f32 %v980, %v1148
        %1150 = vmatmul.bf16.gmra.mxu0 %v708
        %v1151 = vpop.f32.mrf.mxu0
        %v1152 = vadd.f32 %v983, %v1151
        %v1153 = vpop.f32.mrf.mxu0
        %v1154 = vadd.f32 %v985, %v1153
        %1155 = vmatmul.bf16.gmra.mxu0 %v710
        %v1156 = vpop.f32.mrf.mxu0
        %v1157 = vadd.f32 %v988, %v1156
        %v1158 = vpop.f32.mrf.mxu0
        %v1159 = vadd.f32 %v990, %v1158
        %1160 = vmatmul.bf16.gmra.mxu0 %v712
        %v1161 = vpop.f32.mrf.mxu0
        %v1162 = vadd.f32 %v993, %v1161
        %v1163 = vpop.f32.mrf.mxu0
        %v1164 = vadd.f32 %v995, %v1163
        %1165 = vmatmul.bf16.gmra.mxu0 %v714
        %v1166 = vpop.f32.mrf.mxu0
        %v1167 = vadd.f32 %v998, %v1166
        %v1168 = vpop.f32.mrf.mxu0
        %v1169 = vadd.f32 %v1000, %v1168
        %1170 = vmatmul.bf16.gmra.mxu0 %v716
        %v1171 = vpop.f32.mrf.mxu0
        %v1172 = vadd.f32 %v1003, %v1171
        %v1173 = vpop.f32.mrf.mxu0
        %v1174 = vadd.f32 %v1005, %v1173
        %1175 = vmatmul.bf16.gmra.mxu0 %v718
        %v1176 = vpop.f32.mrf.mxu0
        %v1177 = vadd.f32 %v1008, %v1176
        %v1178 = vpop.f32.mrf.mxu0
        %v1179 = vadd.f32 %v1010, %v1178
        %1180 = vmatmul.bf16.gmra.mxu0 %v720
        %v1181 = vpop.f32.mrf.mxu0
        %v1182 = vadd.f32 %v1013, %v1181
        %v1183 = vpop.f32.mrf.mxu0
        %v1184 = vadd.f32 %v1015, %v1183
        %1185 = vmatmul.bf16.gmra.mxu0 %v722
        %v1186 = vpop.f32.mrf.mxu0
        %v1187 = vadd.f32 %v1018, %v1186
        %v1188 = vpop.f32.mrf.mxu0
        %v1189 = vadd.f32 %v1020, %v1188
        %1190 = vmatmul.bf16.gmra.mxu0 %v724
        %v1191 = vpop.f32.mrf.mxu0
        %v1192 = vadd.f32 %v1023, %v1191
        %v1193 = vpop.f32.mrf.mxu0
        %v1194 = vadd.f32 %v1025, %v1193
        %1195 = vmatmul.bf16.gmra.mxu0 %v726
        %v1196 = vpop.f32.mrf.mxu0
        %v1197 = vadd.f32 %v1028, %v1196
        %v1198 = vpop.f32.mrf.mxu0
        %v1199 = vadd.f32 %v1030, %v1198
        %1200 = vmatmul.bf16.gmra.mxu0 %v728
        %v1201 = vpop.f32.mrf.mxu0
        %v1202 = vadd.f32 %v1033, %v1201
        %v1203 = vpop.f32.mrf.mxu0
        %v1204 = vadd.f32 %v1035, %v1203
        %1205 = vmatmul.bf16.gmra.mxu0 %v730
        %v1206 = vpop.f32.mrf.mxu0
        %v1207 = vadd.f32 %v1038, %v1206
        %v1208 = vpop.f32.mrf.mxu0
        %v1209 = vadd.f32 %v1040, %v1208
        %1210 = vmatmul.bf16.gmra.mxu0 %v732
        %v1211 = vpop.f32.mrf.mxu0
        %v1212 = vadd.f32 %v1043, %v1211
        %v1213 = vpop.f32.mrf.mxu0
        %v1214 = vadd.f32 %v1045, %v1213
        %1215 = vmatmul.bf16.gmra.mxu0 %v734
        %v1216 = vpop.f32.mrf.mxu0
        %v1217 = vadd.f32 %v1048, %v1216
        %v1218 = vpop.f32.mrf.mxu0
        %v1219 = vadd.f32 %v1050, %v1218
        %1220 = vmatmul.bf16.gmra.mxu0 %v736
        %v1221 = vpop.f32.mrf.mxu0
        %v1222 = vadd.f32 %v1053, %v1221
        %v1223 = vpop.f32.mrf.mxu0
        %v1224 = vadd.f32 %v1055, %v1223
        %1225 = vmatmul.bf16.gmra.mxu0 %v738
        %v1226 = vpop.f32.mrf.mxu0
        %v1227 = vadd.f32 %v1058, %v1226
        %v1228 = vpop.f32.mrf.mxu0
        %v1229 = vadd.f32 %v1060, %v1228
        %1230 = vmatmul.bf16.gmra.mxu0 %v740
        %v1231 = vpop.f32.mrf.mxu0
        %v1232 = vadd.f32 %v1063, %v1231
        %v1233 = vpop.f32.mrf.mxu0
        %v1234 = vadd.f32 %v1065, %v1233
        %1235 = vmatmul.bf16.gmra.mxu0 %v742
        %v1236 = vpop.f32.mrf.mxu0
        %v1237 = vadd.f32 %v1068, %v1236
        %v1238 = vpop.f32.mrf.mxu0
        %v1239 = vadd.f32 %v1070, %v1238
        %1240 = vdwg.mxu0
        %v1241 = vadd.f32 %v327, %v1082
        %v1242 = vadd.f32 %v328, %v1084
        %v1243 = vadd.f32 %v329, %v1087
        %v1244 = vadd.f32 %v330, %v1089
        %v1245 = vadd.f32 %v331, %v1092
        %v1246 = vadd.f32 %v332, %v1094
        %v1247 = vadd.f32 %v333, %v1097
        %v1248 = vadd.f32 %v334, %v1099
        %v1249 = vadd.f32 %v335, %v1102
        %v1250 = vadd.f32 %v336, %v1104
        %v1251 = vadd.f32 %v337, %v1107
        %v1252 = vadd.f32 %v338, %v1109
        %v1253 = vadd.f32 %v339, %v1112
        %v1254 = vadd.f32 %v340, %v1114
        %v1255 = vadd.f32 %v341, %v1117
        %v1256 = vadd.f32 %v342, %v1119
        %v1257 = vadd.f32 %v343, %v1122
        %v1258 = vadd.f32 %v344, %v1124
        %v1259 = vadd.f32 %v345, %v1127
        %v1260 = vadd.f32 %v346, %v1129
        %v1261 = vadd.f32 %v347, %v1132
        %v1262 = vadd.f32 %v348, %v1134
        %v1263 = vadd.f32 %v349, %v1137
        %v1264 = vadd.f32 %v350, %v1139
        %v1265 = vadd.f32 %v351, %v1142
        %v1266 = vadd.f32 %v352, %v1144
        %v1267 = vadd.f32 %v353, %v1147
        %v1268 = vadd.f32 %v354, %v1149
        %v1269 = vadd.f32 %v355, %v1152
        %v1270 = vadd.f32 %v356, %v1154
        %v1271 = vadd.f32 %v357, %v1157
        %v1272 = vadd.f32 %v358, %v1159
        %v1273 = vadd.f32 %v359, %v1162
        %v1274 = vadd.f32 %v360, %v1164
        %v1275 = vadd.f32 %v361, %v1167
        %v1276 = vadd.f32 %v362, %v1169
        %v1277 = vadd.f32 %v363, %v1172
        %v1278 = vadd.f32 %v364, %v1174
        %v1279 = vadd.f32 %v365, %v1177
        %v1280 = vadd.f32 %v366, %v1179
        %v1281 = vadd.f32 %v367, %v1182
        %v1282 = vadd.f32 %v368, %v1184
        %v1283 = vadd.f32 %v369, %v1187
        %v1284 = vadd.f32 %v370, %v1189
        %v1285 = vadd.f32 %v371, %v1192
        %v1286 = vadd.f32 %v372, %v1194
        %v1287 = vadd.f32 %v373, %v1197
        %v1288 = vadd.f32 %v374, %v1199
        %v1289 = vadd.f32 %v375, %v1202
        %v1290 = vadd.f32 %v376, %v1204
        %v1291 = vadd.f32 %v377, %v1207
        %v1292 = vadd.f32 %v378, %v1209
        %v1293 = vadd.f32 %v379, %v1212
        %v1294 = vadd.f32 %v380, %v1214
        %v1295 = vadd.f32 %v381, %v1217
        %v1296 = vadd.f32 %v382, %v1219
        %v1297 = vadd.f32 %v383, %v1222
        %v1298 = vadd.f32 %v384, %v1224
        %v1299 = vadd.f32 %v385, %v1227
        %v1300 = vadd.f32 %v386, %v1229
        %v1301 = vadd.f32 %v387, %v1232
        %v1302 = vadd.f32 %v388, %v1234
        %v1303 = vadd.f32 %v389, %v1237
        %v1304 = vadd.f32 %v390, %v1239
        %1305 = vst [vmem:[#allocation2] sm:$0xff] %v1241
        %1306 = vst [vmem:[#allocation2 + $0x8] sm:$0xff] %v1242
        %1307 = vst [vmem:[#allocation2 + $0x10] sm:$0xff] %v1243
        %1308 = vst [vmem:[#allocation2 + $0x18] sm:$0xff] %v1244
        %1309 = vst [vmem:[#allocation2 + $0x20] sm:$0xff] %v1245
        %1310 = vst [vmem:[#allocation2 + $0x28] sm:$0xff] %v1246
        %1311 = vst [vmem:[#allocation2 + $0x30] sm:$0xff] %v1247
        %1312 = vst [vmem:[#allocation2 + $0x38] sm:$0xff] %v1248
        %1313 = vst [vmem:[#allocation2 + $0x40] sm:$0xff] %v1249
        %1314 = vst [vmem:[#allocation2 + $0x48] sm:$0xff] %v1250
        %1315 = vst [vmem:[#allocation2 + $0x50] sm:$0xff] %v1251
        %1316 = vst [vmem:[#allocation2 + $0x58] sm:$0xff] %v1252
        %1317 = vst [vmem:[#allocation2 + $0x60] sm:$0xff] %v1253
        %1318 = vst [vmem:[#allocation2 + $0x68] sm:$0xff] %v1254
        %1319 = vst [vmem:[#allocation2 + $0x70] sm:$0xff] %v1255
        %1320 = vst [vmem:[#allocation2 + $0x78] sm:$0xff] %v1256
        %1321 = vst [vmem:[#allocation2 + $0x80] sm:$0xff] %v1257
        %1322 = vst [vmem:[#allocation2 + $0x88] sm:$0xff] %v1258
        %1323 = vst [vmem:[#allocation2 + $0x90] sm:$0xff] %v1259
        %1324 = vst [vmem:[#allocation2 + $0x98] sm:$0xff] %v1260
        %1325 = vst [vmem:[#allocation2 + $0xa0] sm:$0xff] %v1261
        %1326 = vst [vmem:[#allocation2 + $0xa8] sm:$0xff] %v1262
        %1327 = vst [vmem:[#allocation2 + $0xb0] sm:$0xff] %v1263
        %1328 = vst [vmem:[#allocation2 + $0xb8] sm:$0xff] %v1264
        %1329 = vst [vmem:[#allocation2 + $0xc0] sm:$0xff] %v1265
        %1330 = vst [vmem:[#allocation2 + $0xc8] sm:$0xff] %v1266
        %1331 = vst [vmem:[#allocation2 + $0xd0] sm:$0xff] %v1267
        %1332 = vst [vmem:[#allocation2 + $0xd8] sm:$0xff] %v1268
        %1333 = vst [vmem:[#allocation2 + $0xe0] sm:$0xff] %v1269
        %1334 = vst [vmem:[#allocation2 + $0xe8] sm:$0xff] %v1270
        %1335 = vst [vmem:[#allocation2 + $0xf0] sm:$0xff] %v1271
        %1336 = vst [vmem:[#allocation2 + $0xf8] sm:$0xff] %v1272
        %1337 = vst [vmem:[#allocation2 + $0x100] sm:$0xff] %v1273
        %1338 = vst [vmem:[#allocation2 + $0x108] sm:$0xff] %v1274
        %1339 = vst [vmem:[#allocation2 + $0x110] sm:$0xff] %v1275
        %1340 = vst [vmem:[#allocation2 + $0x118] sm:$0xff] %v1276
        %1341 = vst [vmem:[#allocation2 + $0x120] sm:$0xff] %v1277
        %1342 = vst [vmem:[#allocation2 + $0x128] sm:$0xff] %v1278
        %1343 = vst [vmem:[#allocation2 + $0x130] sm:$0xff] %v1279
        %1344 = vst [vmem:[#allocation2 + $0x138] sm:$0xff] %v1280
        %1345 = vst [vmem:[#allocation2 + $0x140] sm:$0xff] %v1281
        %1346 = vst [vmem:[#allocation2 + $0x148] sm:$0xff] %v1282
        %1347 = vst [vmem:[#allocation2 + $0x150] sm:$0xff] %v1283
        %1348 = vst [vmem:[#allocation2 + $0x158] sm:$0xff] %v1284
        %1349 = vst [vmem:[#allocation2 + $0x160] sm:$0xff] %v1285
        %1350 = vst [vmem:[#allocation2 + $0x168] sm:$0xff] %v1286
        %1351 = vst [vmem:[#allocation2 + $0x170] sm:$0xff] %v1287
        %1352 = vst [vmem:[#allocation2 + $0x178] sm:$0xff] %v1288
        %1353 = vst [vmem:[#allocation2 + $0x180] sm:$0xff] %v1289
        %1354 = vst [vmem:[#allocation2 + $0x188] sm:$0xff] %v1290
        %1355 = vst [vmem:[#allocation2 + $0x190] sm:$0xff] %v1291
        %1356 = vst [vmem:[#allocation2 + $0x198] sm:$0xff] %v1292
        %1357 = vst [vmem:[#allocation2 + $0x1a0] sm:$0xff] %v1293
        %1358 = vst [vmem:[#allocation2 + $0x1a8] sm:$0xff] %v1294
        %1359 = vst [vmem:[#allocation2 + $0x1b0] sm:$0xff] %v1295
        %1360 = vst [vmem:[#allocation2 + $0x1b8] sm:$0xff] %v1296
        %1361 = vst [vmem:[#allocation2 + $0x1c0] sm:$0xff] %v1297
        %1362 = vst [vmem:[#allocation2 + $0x1c8] sm:$0xff] %v1298
        %1363 = vst [vmem:[#allocation2 + $0x1d0] sm:$0xff] %v1299
        %1364 = vst [vmem:[#allocation2 + $0x1d8] sm:$0xff] %v1300
        %1365 = vst [vmem:[#allocation2 + $0x1e0] sm:$0xff] %v1301
        %1366 = vst [vmem:[#allocation2 + $0x1e8] sm:$0xff] %v1302
        %1367 = vst [vmem:[#allocation2 + $0x1f0] sm:$0xff] %v1303
        %1368 = vst [vmem:[#allocation2 + $0x1f8] sm:$0xff] %v1304
        // Predicated region
        $region37: #{conv_im2col.1} parent=31 // pred_check
          %p1369 = pneg %p259
        $region38: #{conv_im2col.1} parent=31 // pred_check_branch
          %1371 = sbr.rel (%p1369) target = $region40
        $region39: #{conv_im2col.1} parent=31 // pred_region
          %v1372 = vld [vmem:[#allocation2] sm:$0xff]
          %v1373 = vld [vmem:[#allocation2 + $0x8] sm:$0xff]
          %v1374 = vld [vmem:[#allocation2 + $0x10] sm:$0xff]
          %v1375 = vld [vmem:[#allocation2 + $0x18] sm:$0xff]
          %v1376 = vld [vmem:[#allocation2 + $0x20] sm:$0xff]
          %v1377 = vld [vmem:[#allocation2 + $0x28] sm:$0xff]
          %v1378 = vld [vmem:[#allocation2 + $0x30] sm:$0xff]
          %v1379 = vld [vmem:[#allocation2 + $0x38] sm:$0xff]
          %v1380 = vld [vmem:[#allocation2 + $0x40] sm:$0xff]
          %v1381 = vld [vmem:[#allocation2 + $0x48] sm:$0xff]
          %v1382 = vld [vmem:[#allocation2 + $0x50] sm:$0xff]
          %v1383 = vld [vmem:[#allocation2 + $0x58] sm:$0xff]
          %v1384 = vld [vmem:[#allocation2 + $0x60] sm:$0xff]
          %v1385 = vld [vmem:[#allocation2 + $0x68] sm:$0xff]
          %v1386 = vld [vmem:[#allocation2 + $0x70] sm:$0xff]
          %v1387 = vld [vmem:[#allocation2 + $0x78] sm:$0xff]
          %v1388 = vld [vmem:[#allocation2 + $0x80] sm:$0xff]
          %v1389 = vld [vmem:[#allocation2 + $0x88] sm:$0xff]
          %v1390 = vld [vmem:[#allocation2 + $0x90] sm:$0xff]
          %v1391 = vld [vmem:[#allocation2 + $0x98] sm:$0xff]
          %v1392 = vld [vmem:[#allocation2 + $0xa0] sm:$0xff]
          %v1393 = vld [vmem:[#allocation2 + $0xa8] sm:$0xff]
          %v1394 = vld [vmem:[#allocation2 + $0xb0] sm:$0xff]
          %v1395 = vld [vmem:[#allocation2 + $0xb8] sm:$0xff]
          %v1396 = vld [vmem:[#allocation2 + $0xc0] sm:$0xff]
          %v1397 = vld [vmem:[#allocation2 + $0xc8] sm:$0xff]
          %v1398 = vld [vmem:[#allocation2 + $0xd0] sm:$0xff]
          %v1399 = vld [vmem:[#allocation2 + $0xd8] sm:$0xff]
          %v1400 = vld [vmem:[#allocation2 + $0xe0] sm:$0xff]
          %v1401 = vld [vmem:[#allocation2 + $0xe8] sm:$0xff]
          %v1402 = vld [vmem:[#allocation2 + $0xf0] sm:$0xff]
          %v1403 = vld [vmem:[#allocation2 + $0xf8] sm:$0xff]
          %v1404 = vld [vmem:[#allocation2 + $0x100] sm:$0xff]
          %v1405 = vld [vmem:[#allocation2 + $0x108] sm:$0xff]
          %v1406 = vld [vmem:[#allocation2 + $0x110] sm:$0xff]
          %v1407 = vld [vmem:[#allocation2 + $0x118] sm:$0xff]
          %v1408 = vld [vmem:[#allocation2 + $0x120] sm:$0xff]
          %v1409 = vld [vmem:[#allocation2 + $0x128] sm:$0xff]
          %v1410 = vld [vmem:[#allocation2 + $0x130] sm:$0xff]
          %v1411 = vld [vmem:[#allocation2 + $0x138] sm:$0xff]
          %v1412 = vld [vmem:[#allocation2 + $0x140] sm:$0xff]
          %v1413 = vld [vmem:[#allocation2 + $0x148] sm:$0xff]
          %v1414 = vld [vmem:[#allocation2 + $0x150] sm:$0xff]
          %v1415 = vld [vmem:[#allocation2 + $0x158] sm:$0xff]
          %v1416 = vld [vmem:[#allocation2 + $0x160] sm:$0xff]
          %v1417 = vld [vmem:[#allocation2 + $0x168] sm:$0xff]
          %v1418 = vld [vmem:[#allocation2 + $0x170] sm:$0xff]
          %v1419 = vld [vmem:[#allocation2 + $0x178] sm:$0xff]
          %v1420 = vld [vmem:[#allocation2 + $0x180] sm:$0xff]
          %v1421 = vld [vmem:[#allocation2 + $0x188] sm:$0xff]
          %v1422 = vld [vmem:[#allocation2 + $0x190] sm:$0xff]
          %v1423 = vld [vmem:[#allocation2 + $0x198] sm:$0xff]
          %v1424 = vld [vmem:[#allocation2 + $0x1a0] sm:$0xff]
          %v1425 = vld [vmem:[#allocation2 + $0x1a8] sm:$0xff]
          %v1426 = vld [vmem:[#allocation2 + $0x1b0] sm:$0xff]
          %v1427 = vld [vmem:[#allocation2 + $0x1b8] sm:$0xff]
          %v1428 = vld [vmem:[#allocation2 + $0x1c0] sm:$0xff]
          %v1429 = vld [vmem:[#allocation2 + $0x1c8] sm:$0xff]
          %v1430 = vld [vmem:[#allocation2 + $0x1d0] sm:$0xff]
          %v1431 = vld [vmem:[#allocation2 + $0x1d8] sm:$0xff]
          %v1432 = vld [vmem:[#allocation2 + $0x1e0] sm:$0xff]
          %v1433 = vld [vmem:[#allocation2 + $0x1e8] sm:$0xff]
          %v1434 = vld [vmem:[#allocation2 + $0x1f0] sm:$0xff]
          %v1435 = vld [vmem:[#allocation2 + $0x1f8] sm:$0xff]
          %v1436 = vld [vmem:[%s257] sm:$0x1]
          %v1438 = vperm.slane %v1436, 0
          %v1440 = vadd.f32 %v1372, %v1438
          %v1441 = vadd.f32 %v1373, %v1438
          %v1442 = vadd.f32 %v1374, %v1438
          %v1443 = vadd.f32 %v1375, %v1438
          %v1444 = vadd.f32 %v1376, %v1438
          %v1445 = vadd.f32 %v1377, %v1438
          %v1446 = vadd.f32 %v1378, %v1438
          %v1447 = vadd.f32 %v1379, %v1438
          %v1448 = vadd.f32 %v1380, %v1438
          %v1449 = vadd.f32 %v1381, %v1438
          %v1450 = vadd.f32 %v1382, %v1438
          %v1451 = vadd.f32 %v1383, %v1438
          %v1452 = vadd.f32 %v1384, %v1438
          %v1453 = vadd.f32 %v1385, %v1438
          %v1454 = vadd.f32 %v1386, %v1438
          %v1455 = vadd.f32 %v1387, %v1438
          %v1456 = vadd.f32 %v1388, %v1438
          %v1457 = vadd.f32 %v1389, %v1438
          %v1458 = vadd.f32 %v1390, %v1438
          %v1459 = vadd.f32 %v1391, %v1438
          %v1460 = vadd.f32 %v1392, %v1438
          %v1461 = vadd.f32 %v1393, %v1438
          %v1462 = vadd.f32 %v1394, %v1438
          %v1463 = vadd.f32 %v1395, %v1438
          %v1464 = vadd.f32 %v1396, %v1438
          %v1465 = vadd.f32 %v1397, %v1438
          %v1466 = vadd.f32 %v1398, %v1438
          %v1467 = vadd.f32 %v1399, %v1438
          %v1468 = vadd.f32 %v1400, %v1438
          %v1469 = vadd.f32 %v1401, %v1438
          %v1470 = vadd.f32 %v1402, %v1438
          %v1471 = vadd.f32 %v1403, %v1438
          %v1472 = vadd.f32 %v1404, %v1438
          %v1473 = vadd.f32 %v1405, %v1438
          %v1474 = vadd.f32 %v1406, %v1438
          %v1475 = vadd.f32 %v1407, %v1438
          %v1476 = vadd.f32 %v1408, %v1438
          %v1477 = vadd.f32 %v1409, %v1438
          %v1478 = vadd.f32 %v1410, %v1438
          %v1479 = vadd.f32 %v1411, %v1438
          %v1480 = vadd.f32 %v1412, %v1438
          %v1481 = vadd.f32 %v1413, %v1438
          %v1482 = vadd.f32 %v1414, %v1438
          %v1483 = vadd.f32 %v1415, %v1438
          %v1484 = vadd.f32 %v1416, %v1438
          %v1485 = vadd.f32 %v1417, %v1438
          %v1486 = vadd.f32 %v1418, %v1438
          %v1487 = vadd.f32 %v1419, %v1438
          %v1488 = vadd.f32 %v1420, %v1438
          %v1489 = vadd.f32 %v1421, %v1438
          %v1490 = vadd.f32 %v1422, %v1438
          %v1491 = vadd.f32 %v1423, %v1438
          %v1492 = vadd.f32 %v1424, %v1438
          %v1493 = vadd.f32 %v1425, %v1438
          %v1494 = vadd.f32 %v1426, %v1438
          %v1495 = vadd.f32 %v1427, %v1438
          %v1496 = vadd.f32 %v1428, %v1438
          %v1497 = vadd.f32 %v1429, %v1438
          %v1498 = vadd.f32 %v1430, %v1438
          %v1499 = vadd.f32 %v1431, %v1438
          %v1500 = vadd.f32 %v1432, %v1438
          %v1501 = vadd.f32 %v1433, %v1438
          %v1502 = vadd.f32 %v1434, %v1438
          %v1503 = vadd.f32 %v1435, %v1438
          %v1504 = vmax.f32 %v1440, 0.0
          %v1505 = vmax.f32 %v1441, 0.0
          %v1506 = vmax.f32 %v1442, 0.0
          %v1507 = vmax.f32 %v1443, 0.0
          %v1508 = vmax.f32 %v1444, 0.0
          %v1509 = vmax.f32 %v1445, 0.0
          %v1510 = vmax.f32 %v1446, 0.0
          %v1511 = vmax.f32 %v1447, 0.0
          %v1512 = vmax.f32 %v1448, 0.0
          %v1513 = vmax.f32 %v1449, 0.0
          %v1514 = vmax.f32 %v1450, 0.0
          %v1515 = vmax.f32 %v1451, 0.0
          %v1516 = vmax.f32 %v1452, 0.0
          %v1517 = vmax.f32 %v1453, 0.0
          %v1518 = vmax.f32 %v1454, 0.0
          %v1519 = vmax.f32 %v1455, 0.0
          %v1520 = vmax.f32 %v1456, 0.0
          %v1521 = vmax.f32 %v1457, 0.0
          %v1522 = vmax.f32 %v1458, 0.0
          %v1523 = vmax.f32 %v1459, 0.0
          %v1524 = vmax.f32 %v1460, 0.0
          %v1525 = vmax.f32 %v1461, 0.0
          %v1526 = vmax.f32 %v1462, 0.0
          %v1527 = vmax.f32 %v1463, 0.0
          %v1528 = vmax.f32 %v1464, 0.0
          %v1529 = vmax.f32 %v1465, 0.0
          %v1530 = vmax.f32 %v1466, 0.0
          %v1531 = vmax.f32 %v1467, 0.0
          %v1532 = vmax.f32 %v1468, 0.0
          %v1533 = vmax.f32 %v1469, 0.0
          %v1534 = vmax.f32 %v1470, 0.0
          %v1535 = vmax.f32 %v1471, 0.0
          %v1536 = vmax.f32 %v1472, 0.0
          %v1537 = vmax.f32 %v1473, 0.0
          %v1538 = vmax.f32 %v1474, 0.0
          %v1539 = vmax.f32 %v1475, 0.0
          %v1540 = vmax.f32 %v1476, 0.0
          %v1541 = vmax.f32 %v1477, 0.0
          %v1542 = vmax.f32 %v1478, 0.0
          %v1543 = vmax.f32 %v1479, 0.0
          %v1544 = vmax.f32 %v1480, 0.0
          %v1545 = vmax.f32 %v1481, 0.0
          %v1546 = vmax.f32 %v1482, 0.0
          %v1547 = vmax.f32 %v1483, 0.0
          %v1548 = vmax.f32 %v1484, 0.0
          %v1549 = vmax.f32 %v1485, 0.0
          %v1550 = vmax.f32 %v1486, 0.0
          %v1551 = vmax.f32 %v1487, 0.0
          %v1552 = vmax.f32 %v1488, 0.0
          %v1553 = vmax.f32 %v1489, 0.0
          %v1554 = vmax.f32 %v1490, 0.0
          %v1555 = vmax.f32 %v1491, 0.0
          %v1556 = vmax.f32 %v1492, 0.0
          %v1557 = vmax.f32 %v1493, 0.0
          %v1558 = vmax.f32 %v1494, 0.0
          %v1559 = vmax.f32 %v1495, 0.0
          %v1560 = vmax.f32 %v1496, 0.0
          %v1561 = vmax.f32 %v1497, 0.0
          %v1562 = vmax.f32 %v1498, 0.0
          %v1563 = vmax.f32 %v1499, 0.0
          %v1564 = vmax.f32 %v1500, 0.0
          %v1565 = vmax.f32 %v1501, 0.0
          %v1566 = vmax.f32 %v1502, 0.0
          %v1567 = vmax.f32 %v1503, 0.0
          %v1568 = vpack.c.bf16 %v1504, %v1504
          %v1569 = vpack.c.bf16 %v1505, %v1505
          %v1570 = vpack.c.bf16 %v1506, %v1506
          %v1571 = vpack.c.bf16 %v1507, %v1507
          %v1572 = vpack.c.bf16 %v1508, %v1508
          %v1573 = vpack.c.bf16 %v1509, %v1509
          %v1574 = vpack.c.bf16 %v1510, %v1510
          %v1575 = vpack.c.bf16 %v1511, %v1511
          %v1576 = vpack.c.bf16 %v1512, %v1512
          %v1577 = vpack.c.bf16 %v1513, %v1513
          %v1578 = vpack.c.bf16 %v1514, %v1514
          %v1579 = vpack.c.bf16 %v1515, %v1515
          %v1580 = vpack.c.bf16 %v1516, %v1516
          %v1581 = vpack.c.bf16 %v1517, %v1517
          %v1582 = vpack.c.bf16 %v1518, %v1518
          %v1583 = vpack.c.bf16 %v1519, %v1519
          %v1584 = vpack.c.bf16 %v1520, %v1520
          %v1585 = vpack.c.bf16 %v1521, %v1521
          %v1586 = vpack.c.bf16 %v1522, %v1522
          %v1587 = vpack.c.bf16 %v1523, %v1523
          %v1588 = vpack.c.bf16 %v1524, %v1524
          %v1589 = vpack.c.bf16 %v1525, %v1525
          %v1590 = vpack.c.bf16 %v1526, %v1526
          %v1591 = vpack.c.bf16 %v1527, %v1527
          %v1592 = vpack.c.bf16 %v1528, %v1528
          %v1593 = vpack.c.bf16 %v1529, %v1529
          %v1594 = vpack.c.bf16 %v1530, %v1530
          %v1595 = vpack.c.bf16 %v1531, %v1531
          %v1596 = vpack.c.bf16 %v1532, %v1532
          %v1597 = vpack.c.bf16 %v1533, %v1533
          %v1598 = vpack.c.bf16 %v1534, %v1534
          %v1599 = vpack.c.bf16 %v1535, %v1535
          %v1600 = vpack.c.bf16 %v1536, %v1536
          %v1601 = vpack.c.bf16 %v1537, %v1537
          %v1602 = vpack.c.bf16 %v1538, %v1538
          %v1603 = vpack.c.bf16 %v1539, %v1539
          %v1604 = vpack.c.bf16 %v1540, %v1540
          %v1605 = vpack.c.bf16 %v1541, %v1541
          %v1606 = vpack.c.bf16 %v1542, %v1542
          %v1607 = vpack.c.bf16 %v1543, %v1543
          %v1608 = vpack.c.bf16 %v1544, %v1544
          %v1609 = vpack.c.bf16 %v1545, %v1545
          %v1610 = vpack.c.bf16 %v1546, %v1546
          %v1611 = vpack.c.bf16 %v1547, %v1547
          %v1612 = vpack.c.bf16 %v1548, %v1548
          %v1613 = vpack.c.bf16 %v1549, %v1549
          %v1614 = vpack.c.bf16 %v1550, %v1550
          %v1615 = vpack.c.bf16 %v1551, %v1551
          %v1616 = vpack.c.bf16 %v1552, %v1552
          %v1617 = vpack.c.bf16 %v1553, %v1553
          %v1618 = vpack.c.bf16 %v1554, %v1554
          %v1619 = vpack.c.bf16 %v1555, %v1555
          %v1620 = vpack.c.bf16 %v1556, %v1556
          %v1621 = vpack.c.bf16 %v1557, %v1557
          %v1622 = vpack.c.bf16 %v1558, %v1558
          %v1623 = vpack.c.bf16 %v1559, %v1559
          %v1624 = vpack.c.bf16 %v1560, %v1560
          %v1625 = vpack.c.bf16 %v1561, %v1561
          %v1626 = vpack.c.bf16 %v1562, %v1562
          %v1627 = vpack.c.bf16 %v1563, %v1563
          %v1628 = vpack.c.bf16 %v1564, %v1564
          %v1629 = vpack.c.bf16 %v1565, %v1565
          %v1630 = vpack.c.bf16 %v1566, %v1566
          %v1631 = vpack.c.bf16 %v1567, %v1567
          %1632 = vst [vmem:[%s233] sm:$0xf] %v1568
          %1633 = vst [vmem:[%s233 + $0x4] sm:$0xf] %v1569
          %1634 = vst [vmem:[%s233 + $0x8] sm:$0xf] %v1570
          %1635 = vst [vmem:[%s233 + $0xc] sm:$0xf] %v1571
          %1636 = vst [vmem:[%s233 + $0x10] sm:$0xf] %v1572
          %1637 = vst [vmem:[%s233 + $0x14] sm:$0xf] %v1573
          %1638 = vst [vmem:[%s233 + $0x18] sm:$0xf] %v1574
          %1639 = vst [vmem:[%s233 + $0x1c] sm:$0xf] %v1575
          %1640 = vst [vmem:[%s233 + $0x20] sm:$0xf] %v1576
          %1641 = vst [vmem:[%s233 + $0x24] sm:$0xf] %v1577
          %1642 = vst [vmem:[%s233 + $0x28] sm:$0xf] %v1578
          %1643 = vst [vmem:[%s233 + $0x2c] sm:$0xf] %v1579
          %1644 = vst [vmem:[%s233 + $0x30] sm:$0xf] %v1580
          %1645 = vst [vmem:[%s233 + $0x34] sm:$0xf] %v1581
          %1646 = vst [vmem:[%s233 + $0x38] sm:$0xf] %v1582
          %1647 = vst [vmem:[%s233 + $0x3c] sm:$0xf] %v1583
          %1648 = vst [vmem:[%s233 + $0x40] sm:$0xf] %v1584
          %1649 = vst [vmem:[%s233 + $0x44] sm:$0xf] %v1585
          %1650 = vst [vmem:[%s233 + $0x48] sm:$0xf] %v1586
          %1651 = vst [vmem:[%s233 + $0x4c] sm:$0xf] %v1587
          %1652 = vst [vmem:[%s233 + $0x50] sm:$0xf] %v1588
          %1653 = vst [vmem:[%s233 + $0x54] sm:$0xf] %v1589
          %1654 = vst [vmem:[%s233 + $0x58] sm:$0xf] %v1590
          %1655 = vst [vmem:[%s233 + $0x5c] sm:$0xf] %v1591
          %1656 = vst [vmem:[%s233 + $0x60] sm:$0xf] %v1592
          %1657 = vst [vmem:[%s233 + $0x64] sm:$0xf] %v1593
          %1658 = vst [vmem:[%s233 + $0x68] sm:$0xf] %v1594
          %1659 = vst [vmem:[%s233 + $0x6c] sm:$0xf] %v1595
          %1660 = vst [vmem:[%s233 + $0x70] sm:$0xf] %v1596
          %1661 = vst [vmem:[%s233 + $0x74] sm:$0xf] %v1597
          %1662 = vst [vmem:[%s233 + $0x78] sm:$0xf] %v1598
          %1663 = vst [vmem:[%s233 + $0x7c] sm:$0xf] %v1599
          %1664 = vst [vmem:[%s233 + $0x80] sm:$0xf] %v1600
          %1665 = vst [vmem:[%s233 + $0x84] sm:$0xf] %v1601
          %1666 = vst [vmem:[%s233 + $0x88] sm:$0xf] %v1602
          %1667 = vst [vmem:[%s233 + $0x8c] sm:$0xf] %v1603
          %1668 = vst [vmem:[%s233 + $0x90] sm:$0xf] %v1604
          %1669 = vst [vmem:[%s233 + $0x94] sm:$0xf] %v1605
          %1670 = vst [vmem:[%s233 + $0x98] sm:$0xf] %v1606
          %1671 = vst [vmem:[%s233 + $0x9c] sm:$0xf] %v1607
          %1672 = vst [vmem:[%s233 + $0xa0] sm:$0xf] %v1608
          %1673 = vst [vmem:[%s233 + $0xa4] sm:$0xf] %v1609
          %1674 = vst [vmem:[%s233 + $0xa8] sm:$0xf] %v1610
          %1675 = vst [vmem:[%s233 + $0xac] sm:$0xf] %v1611
          %1676 = vst [vmem:[%s233 + $0xb0] sm:$0xf] %v1612
          %1677 = vst [vmem:[%s233 + $0xb4] sm:$0xf] %v1613
          %1678 = vst [vmem:[%s233 + $0xb8] sm:$0xf] %v1614
          %1679 = vst [vmem:[%s233 + $0xbc] sm:$0xf] %v1615
          %1680 = vst [vmem:[%s233 + $0xc0] sm:$0xf] %v1616
          %1681 = vst [vmem:[%s233 + $0xc4] sm:$0xf] %v1617
          %1682 = vst [vmem:[%s233 + $0xc8] sm:$0xf] %v1618
          %1683 = vst [vmem:[%s233 + $0xcc] sm:$0xf] %v1619
          %1684 = vst [vmem:[%s233 + $0xd0] sm:$0xf] %v1620
          %1685 = vst [vmem:[%s233 + $0xd4] sm:$0xf] %v1621
          %1686 = vst [vmem:[%s233 + $0xd8] sm:$0xf] %v1622
          %1687 = vst [vmem:[%s233 + $0xdc] sm:$0xf] %v1623
          %1688 = vst [vmem:[%s233 + $0xe0] sm:$0xf] %v1624
          %1689 = vst [vmem:[%s233 + $0xe4] sm:$0xf] %v1625
          %1690 = vst [vmem:[%s233 + $0xe8] sm:$0xf] %v1626
          %1691 = vst [vmem:[%s233 + $0xec] sm:$0xf] %v1627
          %1692 = vst [vmem:[%s233 + $0xf0] sm:$0xf] %v1628
          %1693 = vst [vmem:[%s233 + $0xf4] sm:$0xf] %v1629
          %1694 = vst [vmem:[%s233 + $0xf8] sm:$0xf] %v1630
          %1695 = vst [vmem:[%s233 + $0xfc] sm:$0xf] %v1631
        $region40: #{conv_im2col.1} parent=31 // pred_fallthru
          _
        %s1696 = sand.u32 %s128, 1
        %s1697 = scalar_lea.sflag [#allocation4], %s1696
        %s1698 = sand.u32 %s128, 1
        %s1699 = smul.addr %s1698, 256
        %s1700 = scalar_lea.vmem [#allocation3], %s1699
        // Predicated region
        $region41: #{conv_im2col.1} parent=31 // pred_check
          %p1701 = pneg %p138
        $region42: #{conv_im2col.1} parent=31 // pred_check_branch
          %1703 = sbr.rel (%p1701) target = $region44
        $region43: #{conv_im2col.1} parent=31 // pred_region
          %s1704 = smul.u32 64, %s22
          %1706 = vsyncadd %s1697, 0
          %s1707 = sadd.s32 %s23, %s1704
          %s1708 = smul.addr %s1707, 4
          %s1709 = scalar_lea.hbm %s3, %s1708
          %s1710 = sshll.u32 %s1700, 4
          %s1711 = int_to_ptr.vmem [resolvable:$true] %s1710
          %s1712 = sshll.u32 %s1709, 4
          %s1713 = int_to_ptr.hbm [resolvable:$true] %s1712
          %1718 = dma.vmem_to_hbm [thread:$0]  %s1711, 4096, %s1713, %s1697, 64, 64, 4
        $region44: #{conv_im2col.1} parent=31 // pred_fallthru
          _
      $region32: #{conv_im2col.1} parent=5 // pred_fallthru
        _
      %p1719 = scmp.le.s32.totalorder 2, %s12
      // Predicated region
      $region45: #{conv_im2col.1} parent=5 // pred_check
        %p1720 = pneg %p1719
      $region46: #{conv_im2col.1} parent=5 // pred_check_branch
        %1722 = sbr.rel (%p1720) target = $region48
      $region47: #{conv_im2col.1} parent=5 // pred_region
        %s1723 = ssub.s32 %s12, 2
        // Predicated region
        $region49: #{conv_im2col.1} parent=47 // pred_check
          %p1724 = pneg %p144
        $region50: #{conv_im2col.1} parent=47 // pred_check_branch
          %1726 = sbr.rel (%p1724) target = $region52
        $region51: #{conv_im2col.1} parent=47 // pred_region
          %s1727 = sand.u32 %s129, 1
          %s1728 = scalar_lea.sflag [#allocation4], %s1727
          %s1729 = sand.u32 %s129, 1
          %s1730 = smul.addr %s1729, 256
          %s1731 = scalar_lea.vmem [#allocation3], %s1730
          %1733 = dma.done %s1728, 4096
        $region52: #{conv_im2col.1} parent=47 // pred_fallthru
          _
      $region48: #{conv_im2col.1} parent=5 // pred_fallthru
        _
    $region6: #{conv_im2col.1} parent=1 // loop_footer
      %s16 = sadd.s32 1, %s12
    $region7: #{conv_im2col.1} parent=1 // loop_footer_branch
      %11 = sbr.rel target = $region3
    $region8: #{conv_im2col.1} parent=1 // loop_exit
      _
    %1734 = vsyncpa [#allocation4], 1
    %s1735 = scalar_lea.sflag [#allocation4], 1
    %1736 = vsyncpa %s1735, 1

</llo_original>
